<compile_context>
chip_gen: v7x
topology: tpu7x:2x2x1
jax: 0.10.0
libtpu: 0.0.40
codegen_flags: <defaults>
</compile_context>

<pallas_src>
import numpy as np
import jax
import jax.numpy as jnp
from jax.experimental import pallas as pl
from jax.experimental.pallas import tpu as pltpu

NUM_CLASSES = 20           # human parser classes
PAD_SIZE = (12, 12)        # small-scale analog of the (473, 473) human-parser input
# Normalize constants exactly as in the reference's transforms.Normalize call.
MEAN = np.array([0.406, 0.456, 0.485], np.float32)
STD = np.array([0.225, 0.224, 0.229], np.float32)


# ----------------------------------------------------------------------------
# host-side (numpy) interpolation / pad / crop operators
# ----------------------------------------------------------------------------
def _interp_matrix(out_size, in_size):
    """align_corners=True bilinear interpolation weights, shape (out_size, in_size)."""
    if in_size == 1:
        return np.ones((out_size, 1), np.float32)
    pos = np.linspace(0.0, float(in_size - 1), out_size)
    lo = np.clip(np.floor(pos).astype(np.int64), 0, in_size - 2)
    frac = (pos - lo).astype(np.float32)
    m = np.zeros((out_size, in_size), np.float32)
    m[np.arange(out_size), lo] += 1.0 - frac
    m[np.arange(out_size), lo + 1] += frac
    return m


def _resize_pad_matrices(h, w, size):
    """Operators Ry (size0, h), RxT (w, size1) s.t. Ry @ img @ RxT reproduces
    resize_pad_tensor (bilinear align_corners=True resize + centered zero pad)."""
    if w / h > size[1] / size[0]:
        dw = int(size[1]); dh = int(dw / w * h)
    else:
        dh = int(size[0]); dw = int(dh / h * w)
    h_off = (size[0] - dh) // 2
    w_off = (size[1] - dw) // 2
    ry = np.zeros((size[0], h), np.float32)
    ry[h_off:h_off + dh] = _interp_matrix(dh, h)
    rx = np.zeros((size[1], w), np.float32)
    rx[w_off:w_off + dw] = _interp_matrix(dw, w)
    return ry, rx.T


def _resize_unpad_matrices(h, w, size):
    """Operators Uy (size0, h), UxT (w, size1) s.t. Uy @ img @ UxT reproduces
    resize_unpad_tensor (crop the pad, then bilinear align_corners=True upsample)."""
    h0, ch, w0, cw = 0, h, 0, w
    if size[1] / size[0] > w / h:
        h_pad = int(h - w / size[1] * size[0])
        h0, ch = h_pad // 2, h - h_pad
    elif size[1] / size[0] < w / h:
        w_pad = int(w - h / size[0] * size[1])
        w0, cw = w_pad // 2, w - w_pad
    uy = np.zeros((size[0], h), np.float32)
    uy[:, h0:h0 + ch] = _interp_matrix(size[0], ch)
    ux = np.zeros((size[1], w), np.float32)
    ux[:, w0:w0 + cw] = _interp_matrix(size[1], cw)
    return uy, ux.T


# ----------------------------------------------------------------------------
# Pallas kernels
# ----------------------------------------------------------------------------
def _human_head_kernel(x_ref, ry_ref, rxt_ref, w_ref, b_ref, o_ref):
    # resize_pad of each input channel via two MXU matmuls; the pad is folded into
    # zero rows/cols of Ry / RxT so every store below is a full, aligned block.
    r = [jnp.dot(jnp.dot(ry_ref[...], x_ref[c], preferred_element_type=jnp.float32),
                 rxt_ref[...], preferred_element_type=jnp.float32)
         for c in range(3)]
    # stand-in human-parsing head (1x1 conv over 3 channels, Normalize folded into the
    # weights) as per-class VPU FMAs with scalar weights from SMEM -- a K=3 contraction
    # would waste the MXU.
    for k in range(NUM_CLASSES):
        o_ref[k] = (w_ref[k] * r[0]
                    + w_ref[NUM_CLASSES + k] * r[1]
                    + w_ref[2 * NUM_CLASSES + k] * r[2]
                    + b_ref[k])


def _hands_obj_kernel(logit_ref, uy_ref, uxt_ref, x_ref, p_ref,
                      hands_ref, obj_ref, m_sc, idx_sc):
    k = pl.program_id(0)

    @pl.when(k == 0)
    def _():
        m_sc[...] = jnp.full_like(m_sc, -jnp.inf)
        idx_sc[...] = jnp.zeros_like(idx_sc)

    # resize_unpad of this class' logits (crop folded into zero columns of Uy/UxT),
    # bilinear align_corners=True upsample as two MXU matmuls.
    up = jnp.dot(jnp.dot(uy_ref[...], logit_ref[...], preferred_element_type=jnp.float32),
                 uxt_ref[...], preferred_element_type=jnp.float32)

    # running first-max argmax over the class grid (strict '>' keeps the first maximal
    # class, matching torch.argmax tie-breaking).
    is_new = up > m_sc[...]
    idx_sc[...] = jnp.where(is_new, k, idx_sc[...])
    m_sc[...] = jnp.where(is_new, up, m_sc[...])

    # finalize: hands mask, then the stand-in obj head on cat((x, hands), dim=1) as
    # per-channel VPU FMAs with SMEM scalars (Normalize folded in), thresholded > 0.
    @pl.when(k == NUM_CLASSES - 1)
    def _():
        arg = idx_sc[...]
        hands = jnp.logical_or(arg == 14, arg == 15)
        hands_f = hands.astype(jnp.float32)
        logit = (p_ref[0] * x_ref[0] + p_ref[1] * x_ref[1] + p_ref[2] * x_ref[2]
                 + p_ref[3] * hands_f + p_ref[4])
        hands_ref[...] = hands.astype(jnp.int32)
        obj_ref[...] = (logit > 0.0).astype(jnp.int32)


# ----------------------------------------------------------------------------
# Pallas wrappers
# ----------------------------------------------------------------------------
def pallas_human_parse_logits(x_chw, w_fold, b_fold, pad_size):
    """resize_pad_tensor(x, pad_size) -> stand-in human head; returns (20, PH, PW)."""
    _, h, w = x_chw.shape
    ry, rxt = _resize_pad_matrices(h, w, pad_size)
    return pl.pallas_call(
        _human_head_kernel,
        out_shape=jax.ShapeDtypeStruct((NUM_CLASSES, pad_size[0], pad_size[1]),
                                       jnp.float32),
        in_specs=[
            pl.BlockSpec(memory_space=pltpu.MemorySpace.VMEM),   # x   (3, H, W)
            pl.BlockSpec(memory_space=pltpu.MemorySpace.VMEM),   # Ry  (PH, H)
            pl.BlockSpec(memory_space=pltpu.MemorySpace.VMEM),   # RxT (W, PW)
            pl.BlockSpec(memory_space=pltpu.MemorySpace.SMEM),   # head weights (3*20,)
            pl.BlockSpec(memory_space=pltpu.MemorySpace.SMEM),   # head bias    (20,)
        ],
        out_specs=pl.BlockSpec(memory_space=pltpu.MemorySpace.VMEM),
    )(x_chw, jnp.asarray(ry), jnp.asarray(rxt), w_fold, b_fold)


def pallas_hands_and_obj(logits_pad, x_chw, obj_scalars, out_size):
    """Fused resize_unpad + argmax/hands + obj head; grid over the 20 classes."""
    _, ph, pw = logits_pad.shape
    h, w = out_size
    uy, uxt = _resize_unpad_matrices(ph, pw, (h, w))
    hands, obj = pl.pallas_call(
        _hands_obj_kernel,
        out_shape=(jax.ShapeDtypeStruct((h, w), jnp.int32),
                   jax.ShapeDtypeStruct((h, w), jnp.int32)),
        grid=(NUM_CLASSES,),
        in_specs=[
            pl.BlockSpec((None, ph, pw), lambda k: (k, 0, 0)),   # one class slice / step
            pl.BlockSpec((h, ph), lambda k: (0, 0)),             # Uy  (VMEM resident)
            pl.BlockSpec((pw, w), lambda k: (0, 0)),             # UxT (VMEM resident)
            pl.BlockSpec((3, h, w), lambda k: (0, 0, 0)),        # x   (VMEM resident)
            pl.BlockSpec(memory_space=pltpu.MemorySpace.SMEM),   # obj scalars (5,)
        ],
        out_specs=(pl.BlockSpec((h, w), lambda k: (0, 0)),
                   pl.BlockSpec((h, w), lambda k: (0, 0))),
        scratch_shapes=[pltpu.VMEM((h, w), jnp.float32),         # running max
                        pltpu.VMEM((h, w), jnp.int32)],          # running argmax
        compiler_params=pltpu.CompilerParams(
            dimension_semantics=("arbitrary",)),   # class axis carries the running argmax
    )(logits_pad, jnp.asarray(uy), jnp.asarray(uxt), x_chw, obj_scalars)
    return hands, obj


# ----------------------------------------------------------------------------
# parameters + Normalize folding
# ----------------------------------------------------------------------------
def init_params(key):
    k1, k2, k3, k4, k5 = jax.random.split(key, 5)
    return {
        "human_w": 0.5 * jax.random.normal(k1, (3, NUM_CLASSES), jnp.float32),
        "human_b": 0.1 * jax.random.normal(k2, (NUM_CLASSES,), jnp.float32),
        "obj_wx": 0.5 * jax.random.normal(k3, (3,), jnp.float32),
        "obj_wh": 0.5 * jax.random.normal(k4, (), jnp.float32),
        "obj_b": 0.1 * jax.random.normal(k5, (), jnp.float32),
    }


def _fold_normalize(params, trans):
    """Fold transforms.Normalize(mean, std) into the stand-in head weights.

    Bilinear align_corners=True weights sum to 1, so the per-channel affine commutes
    through resize_pad; the zero-padded border differs under the fold but is exactly
    cropped away by resize_unpad before the argmax, so outputs are unchanged.
    """
    if trans:
        scale = jnp.asarray(1.0 / STD)
        shift = jnp.asarray(-MEAN / STD)
    else:
        scale = jnp.ones(3, jnp.float32)
        shift = jnp.zeros(3, jnp.float32)
    human_w = params["human_w"] * scale[:, None]                 # (3, 20)
    human_b = params["human_b"] + shift @ params["human_w"]      # (20,)
    obj_wx = params["obj_wx"] * scale                            # (3,)
    obj_b = params["obj_b"] + jnp.dot(shift, params["obj_wx"])   # ()
    obj_scalars = jnp.concatenate(
        [obj_wx, params["obj_wh"][None], obj_b[None]]).astype(jnp.float32)  # (5,)
    return human_w.reshape(-1), human_b, obj_scalars


# ----------------------------------------------------------------------------
# ObjectInHand forward
# ----------------------------------------------------------------------------
def object_in_hand_forward(params, x, trans=True):
    """x: (N, 3, H, W) float32 NCHW (N must be 1, as required by the reference cat)."""
    n, c, h, w = x.shape
    assert n == 1 and c == 3
    x_chw = x[0].astype(jnp.float32)                    # (3, H, W), channel-major

    human_w, human_b, obj_scalars = _fold_normalize(params, trans)

    # human parsing path: resize_pad + stand-in head (pad folded into the operators)
    logits_pad = pallas_human_parse_logits(x_chw, human_w, human_b, PAD_SIZE)

    # human_parse_postprocess + obj head, fused.  (The reference's hard-coded
    # [480, 640] unpad size corresponds to the input spatial size in this analog.)
    hands_i, obj_i = pallas_hands_and_obj(logits_pad, x_chw, obj_scalars, (h, w))

    obj_mask = obj_i.astype(jnp.bool_)[None, None]      # (1, 1, H, W)
    hands = hands_i.astype(jnp.bool_)[None]             # (1, H, W)
    return obj_mask, hands


if __name__ == "__main__":
    key = jax.random.PRNGKey(0)
    kx, kp = jax.random.split(key)
    # (N=1, C=3, H=12, W=16): 4:3 aspect like the 480x640 reference input
    x = jax.random.uniform(kx, (1, 3, 12, 16), dtype=jnp.float32)
    params = init_params(kp)

    fwd = jax.jit(object_in_hand_forward)
    obj_mask, hands = fwd(params, x)
    jax.block_until_ready((obj_mask, hands))

    assert obj_mask.shape == (1, 1, 12, 16) and obj_mask.dtype == jnp.bool_
    assert hands.shape == (1, 12, 16) and hands.dtype == jnp.bool_
    print("KERNEL_OK")
</pallas_src>

<mosaic_0001>
module attributes {stable_mosaic.version = 11 : i64} {
  func.func @_hands_obj_kernel(%arg0: i32, %arg1: memref<1x12x12xf32, #tpu.memory_space<vmem>>, %arg2: memref<12x12xf32, #tpu.memory_space<vmem>>, %arg3: memref<12x16xf32, #tpu.memory_space<vmem>>, %arg4: memref<3x12x16xf32, #tpu.memory_space<vmem>>, %arg5: memref<5xf32, #tpu.memory_space<smem>>, %arg6: memref<12x16xi32, #tpu.memory_space<vmem>>, %arg7: memref<12x16xi32, #tpu.memory_space<vmem>>, %arg8: memref<12x16xf32, #tpu.memory_space<vmem>>, %arg9: memref<12x16xi32, #tpu.memory_space<vmem>>) attributes {dimension_semantics = [#tpu.dimension_semantics<arbitrary>], iteration_bounds = array<i64: 20>, scalar_prefetch = 0 : i64, scratch_operands = 2 : i64, tpu.core_type = #tpu.core_type<tc>, window_params = [{transform_indices = @transform_0, window_bounds = array<i64: 1, 12, 12>}, {pipeline_mode = #tpu.pipeline_mode<synchronous>, transform_indices = @transform_1, window_bounds = array<i64: 12, 12>}, {pipeline_mode = #tpu.pipeline_mode<synchronous>, transform_indices = @transform_2, window_bounds = array<i64: 12, 16>}, {pipeline_mode = #tpu.pipeline_mode<synchronous>, transform_indices = @transform_3, window_bounds = array<i64: 3, 12, 16>}, {transform_indices = @transform_4, window_bounds = array<i64: 5>}, {pipeline_mode = #tpu.pipeline_mode<synchronous>, transform_indices = @transform_5, window_bounds = array<i64: 12, 16>}, {pipeline_mode = #tpu.pipeline_mode<synchronous>, transform_indices = @transform_6, window_bounds = array<i64: 12, 16>}]} {
    %c0_i32 = arith.constant 0 : i32
    %0 = arith.cmpi eq, %arg0, %c0_i32 : i32
    %1 = arith.extui %0 : i1 to i32
    %c0_i32_0 = arith.constant 0 : i32
    %2 = arith.cmpi ne, %1, %c0_i32_0 : i32
    scf.if %2 {
      %cst_19 = arith.constant 0xFF800000 : f32
      %21 = vector.broadcast %cst_19 : f32 to vector<12x16xf32>
      %c0_20 = arith.constant 0 : index
      %c0_21 = arith.constant 0 : index
      %22 = vector.load %arg8[%c0_20, %c0_21] : memref<12x16xf32, #tpu.memory_space<vmem>>, vector<12x16xf32>
      tpu.vector_store %arg8[%c0_20, %c0_21], %21 {strides = array<i32>} : memref<12x16xf32, #tpu.memory_space<vmem>>, vector<12x16xf32>,
      %c0_i32_22 = arith.constant 0 : i32
      %23 = vector.broadcast %c0_i32_22 : i32 to vector<12x16xi32>
      %c0_23 = arith.constant 0 : index
      %c0_24 = arith.constant 0 : index
      %24 = vector.load %arg9[%c0_23, %c0_24] : memref<12x16xi32, #tpu.memory_space<vmem>>, vector<12x16xi32>
      tpu.vector_store %arg9[%c0_23, %c0_24], %23 {strides = array<i32>} : memref<12x16xi32, #tpu.memory_space<vmem>>, vector<12x16xi32>,
    } else {
    }
    %c0 = arith.constant 0 : index
    %c0_1 = arith.constant 0 : index
    %3 = vector.load %arg2[%c0, %c0_1] : memref<12x12xf32, #tpu.memory_space<vmem>>, vector<12x12xf32>
    %c0_2 = arith.constant 0 : index
    %c0_3 = arith.constant 0 : index
    %c0_4 = arith.constant 0 : index
    %4 = vector.load %arg1[%c0_2, %c0_3, %c0_4] : memref<1x12x12xf32, #tpu.memory_space<vmem>>, vector<1x12x12xf32>
    %5 = vector.shape_cast %4 : vector<1x12x12xf32> to vector<12x12xf32>
    %cst = arith.constant dense<0.000000e+00> : vector<12x12xf32>
    %6 = tpu.matmul %3, %5, %cst {dimension_numbers = #tpu.dot_dimension_numbers<[1], [0], [0], [1], [0, 0, 1, 1], [], []>} : vector<12x12xf32>, vector<12x12xf32>, vector<12x12xf32> -> vector<12x12xf32>
    %c0_5 = arith.constant 0 : index
    %c0_6 = arith.constant 0 : index
    %7 = vector.load %arg3[%c0_5, %c0_6] : memref<12x16xf32, #tpu.memory_space<vmem>>, vector<12x16xf32>
    %cst_7 = arith.constant dense<0.000000e+00> : vector<12x16xf32>
    %8 = tpu.matmul %6, %7, %cst_7 {dimension_numbers = #tpu.dot_dimension_numbers<[1], [0], [0], [1], [0, 0, 1, 1], [], []>} : vector<12x12xf32>, vector<12x16xf32>, vector<12x16xf32> -> vector<12x16xf32>
    %c0_8 = arith.constant 0 : index
    %c0_9 = arith.constant 0 : index
    %9 = vector.load %arg8[%c0_8, %c0_9] : memref<12x16xf32, #tpu.memory_space<vmem>>, vector<12x16xf32>
    %10 = arith.cmpf ogt, %8, %9 : vector<12x16xf32>
    %c0_10 = arith.constant 0 : index
    %c0_11 = arith.constant 0 : index
    %11 = vector.load %arg9[%c0_10, %c0_11] : memref<12x16xi32, #tpu.memory_space<vmem>>, vector<12x16xi32>
    %12 = vector.broadcast %arg0 : i32 to vector<12x16xi32>
    %13 = arith.select %10, %12, %11 : vector<12x16xi1>, vector<12x16xi32>
    %c0_12 = arith.constant 0 : index
    %c0_13 = arith.constant 0 : index
    %14 = vector.load %arg9[%c0_12, %c0_13] : memref<12x16xi32, #tpu.memory_space<vmem>>, vector<12x16xi32>
    tpu.vector_store %arg9[%c0_12, %c0_13], %13 {strides = array<i32>} : memref<12x16xi32, #tpu.memory_space<vmem>>, vector<12x16xi32>,
    %c0_14 = arith.constant 0 : index
    %c0_15 = arith.constant 0 : index
    %15 = vector.load %arg8[%c0_14, %c0_15] : memref<12x16xf32, #tpu.memory_space<vmem>>, vector<12x16xf32>
    %16 = arith.select %10, %8, %15 : vector<12x16xi1>, vector<12x16xf32>
    %c0_16 = arith.constant 0 : index
    %c0_17 = arith.constant 0 : index
    %17 = vector.load %arg8[%c0_16, %c0_17] : memref<12x16xf32, #tpu.memory_space<vmem>>, vector<12x16xf32>
    tpu.vector_store %arg8[%c0_16, %c0_17], %16 {strides = array<i32>} : memref<12x16xf32, #tpu.memory_space<vmem>>, vector<12x16xf32>,
    %c19_i32 = arith.constant 19 : i32
    %18 = arith.cmpi eq, %arg0, %c19_i32 : i32
    %19 = arith.extui %18 : i1 to i32
    %c0_i32_18 = arith.constant 0 : i32
    %20 = arith.cmpi ne, %19, %c0_i32_18 : i32
    scf.if %20 {
      %c0_19 = arith.constant 0 : index
      %c0_20 = arith.constant 0 : index
      %21 = vector.load %arg9[%c0_19, %c0_20] : memref<12x16xi32, #tpu.memory_space<vmem>>, vector<12x16xi32>
      %c14_i32 = arith.constant 14 : i32
      %22 = vector.broadcast %c14_i32 : i32 to vector<12x16xi32>
      %23 = arith.cmpi eq, %21, %22 : vector<12x16xi32>
      %c15_i32 = arith.constant 15 : i32
      %24 = vector.broadcast %c15_i32 : i32 to vector<12x16xi32>
      %25 = arith.cmpi eq, %21, %24 : vector<12x16xi32>
      %26 = arith.ori %23, %25 : vector<12x16xi1>
      %27 = arith.extui %26 : vector<12x16xi1> to vector<12x16xi32>
      %28 = arith.sitofp %27 : vector<12x16xi32> to vector<12x16xf32>
      %c0_21 = arith.constant 0 : index
      %29 = memref.load %arg5[%c0_21] : memref<5xf32, #tpu.memory_space<smem>>
      %c0_22 = arith.constant 0 : index
      %c0_23 = arith.constant 0 : index
      %c0_24 = arith.constant 0 : index
      %30 = vector.load %arg4[%c0_22, %c0_23, %c0_24] : memref<3x12x16xf32, #tpu.memory_space<vmem>>, vector<1x12x16xf32>
      %31 = vector.shape_cast %30 : vector<1x12x16xf32> to vector<12x16xf32>
      %32 = vector.broadcast %29 : f32 to vector<12x16xf32>
      %33 = arith.mulf %32, %31 : vector<12x16xf32>
      %c1 = arith.constant 1 : index
      %34 = memref.load %arg5[%c1] : memref<5xf32, #tpu.memory_space<smem>>
      %c1_25 = arith.constant 1 : index
      %c0_26 = arith.constant 0 : index
      %c0_27 = arith.constant 0 : index
      %35 = vector.load %arg4[%c1_25, %c0_26, %c0_27] : memref<3x12x16xf32, #tpu.memory_space<vmem>>, vector<1x12x16xf32>
      %36 = vector.shape_cast %35 : vector<1x12x16xf32> to vector<12x16xf32>
      %37 = vector.broadcast %34 : f32 to vector<12x16xf32>
      %38 = arith.mulf %37, %36 : vector<12x16xf32>
      %39 = arith.addf %33, %38 : vector<12x16xf32>
      %c2 = arith.constant 2 : index
      %40 = memref.load %arg5[%c2] : memref<5xf32, #tpu.memory_space<smem>>
      %c2_28 = arith.constant 2 : index
      %c0_29 = arith.constant 0 : index
      %c0_30 = arith.constant 0 : index
      %41 = vector.load %arg4[%c2_28, %c0_29, %c0_30] : memref<3x12x16xf32, #tpu.memory_space<vmem>>, vector<1x12x16xf32>
      %42 = vector.shape_cast %41 : vector<1x12x16xf32> to vector<12x16xf32>
      %43 = vector.broadcast %40 : f32 to vector<12x16xf32>
      %44 = arith.mulf %43, %42 : vector<12x16xf32>
      %45 = arith.addf %39, %44 : vector<12x16xf32>
      %c3 = arith.constant 3 : index
      %46 = memref.load %arg5[%c3] : memref<5xf32, #tpu.memory_space<smem>>
      %47 = vector.broadcast %46 : f32 to vector<12x16xf32>
      %48 = arith.mulf %47, %28 : vector<12x16xf32>
      %49 = arith.addf %45, %48 : vector<12x16xf32>
      %c4 = arith.constant 4 : index
      %50 = memref.load %arg5[%c4] : memref<5xf32, #tpu.memory_space<smem>>
      %51 = vector.broadcast %50 : f32 to vector<12x16xf32>
      %52 = arith.addf %49, %51 : vector<12x16xf32>
      %53 = arith.extui %26 : vector<12x16xi1> to vector<12x16xi32>
      %c0_31 = arith.constant 0 : index
      %c0_32 = arith.constant 0 : index
      %54 = vector.load %arg6[%c0_31, %c0_32] : memref<12x16xi32, #tpu.memory_space<vmem>>, vector<12x16xi32>
      tpu.vector_store %arg6[%c0_31, %c0_32], %53 {strides = array<i32>} : memref<12x16xi32, #tpu.memory_space<vmem>>, vector<12x16xi32>,
      %cst_33 = arith.constant 0.000000e+00 : f32
      %55 = vector.broadcast %cst_33 : f32 to vector<12x16xf32>
      %56 = arith.cmpf ogt, %52, %55 : vector<12x16xf32>
      %57 = arith.extui %56 : vector<12x16xi1> to vector<12x16xi32>
      %c0_34 = arith.constant 0 : index
      %c0_35 = arith.constant 0 : index
      %58 = vector.load %arg7[%c0_34, %c0_35] : memref<12x16xi32, #tpu.memory_space<vmem>>, vector<12x16xi32>
      tpu.vector_store %arg7[%c0_34, %c0_35], %57 {strides = array<i32>} : memref<12x16xi32, #tpu.memory_space<vmem>>, vector<12x16xi32>,
    } else {
    }
    return
  }
  func.func @transform_0(%arg0: i32) -> (i32, i32, i32) {
    %c0_i32 = arith.constant 0 : i32
    %c0_i32_0 = arith.constant 0 : i32
    %c0_i32_1 = arith.constant 0 : i32
    return %arg0, %c0_i32, %c0_i32_0 : i32, i32, i32
  }
  func.func @transform_1(%arg0: i32) -> (i32, i32) {
    %c0_i32 = arith.constant 0 : i32
    %c0_i32_0 = arith.constant 0 : i32
    %c0_i32_1 = arith.constant 0 : i32
    return %c0_i32, %c0_i32_0 : i32, i32
  }
  func.func @transform_2(%arg0: i32) -> (i32, i32) {
    %c0_i32 = arith.constant 0 : i32
    %c0_i32_0 = arith.constant 0 : i32
    %c0_i32_1 = arith.constant 0 : i32
    return %c0_i32, %c0_i32_0 : i32, i32
  }
  func.func @transform_3(%arg0: i32) -> (i32, i32, i32) {
    %c0_i32 = arith.constant 0 : i32
    %c0_i32_0 = arith.constant 0 : i32
    %c0_i32_1 = arith.constant 0 : i32
    %c0_i32_2 = arith.constant 0 : i32
    return %c0_i32, %c0_i32_0, %c0_i32_1 : i32, i32, i32
  }
  func.func @transform_4(%arg0: i32) -> i32 {
    %c0_i32 = arith.constant 0 : i32
    %c0_i32_0 = arith.constant 0 : i32
    return %c0_i32 : i32
  }
  func.func @transform_5(%arg0: i32) -> (i32, i32) {
    %c0_i32 = arith.constant 0 : i32
    %c0_i32_0 = arith.constant 0 : i32
    %c0_i32_1 = arith.constant 0 : i32
    return %c0_i32, %c0_i32_0 : i32, i32
  }
  func.func @transform_6(%arg0: i32) -> (i32, i32) {
    %c0_i32 = arith.constant 0 : i32
    %c0_i32_0 = arith.constant 0 : i32
    %c0_i32_1 = arith.constant 0 : i32
    return %c0_i32, %c0_i32_0 : i32, i32
  }
}

module attributes {stable_mosaic.version = 11 : i64} {
  func.func @_human_head_kernel(%arg0: memref<3x12x16xf32, #tpu.memory_space<vmem>>, %arg1: memref<12x12xf32, #tpu.memory_space<vmem>>, %arg2: memref<16x12xf32, #tpu.memory_space<vmem>>, %arg3: memref<60xf32, #tpu.memory_space<smem>>, %arg4: memref<20xf32, #tpu.memory_space<smem>>, %arg5: memref<20x12x12xf32, #tpu.memory_space<vmem>>) attributes {dimension_semantics = [], scalar_prefetch = 0 : i64, scratch_operands = 0 : i64, tpu.core_type = #tpu.core_type<tc>} {
    %c0 = arith.constant 0 : index
    %c0_0 = arith.constant 0 : index
    %0 = vector.load %arg1[%c0, %c0_0] : memref<12x12xf32, #tpu.memory_space<vmem>>, vector<12x12xf32>
    %c0_1 = arith.constant 0 : index
    %c0_2 = arith.constant 0 : index
    %c0_3 = arith.constant 0 : index
    %1 = vector.load %arg0[%c0_1, %c0_2, %c0_3] : memref<3x12x16xf32, #tpu.memory_space<vmem>>, vector<1x12x16xf32>
    %2 = vector.shape_cast %1 : vector<1x12x16xf32> to vector<12x16xf32>
    %cst = arith.constant dense<0.000000e+00> : vector<12x16xf32>
    %3 = tpu.matmul %0, %2, %cst {dimension_numbers = #tpu.dot_dimension_numbers<[1], [0], [0], [1], [0, 0, 1, 1], [], []>} : vector<12x12xf32>, vector<12x16xf32>, vector<12x16xf32> -> vector<12x16xf32>
    %c0_4 = arith.constant 0 : index
    %c0_5 = arith.constant 0 : index
    %4 = vector.load %arg2[%c0_4, %c0_5] : memref<16x12xf32, #tpu.memory_space<vmem>>, vector<16x12xf32>
    %cst_6 = arith.constant dense<0.000000e+00> : vector<12x12xf32>
    %5 = tpu.matmul %3, %4, %cst_6 {dimension_numbers = #tpu.dot_dimension_numbers<[1], [0], [0], [1], [0, 0, 1, 1], [], []>} : vector<12x16xf32>, vector<16x12xf32>, vector<12x12xf32> -> vector<12x12xf32>
    %c0_7 = arith.constant 0 : index
    %c0_8 = arith.constant 0 : index
    %6 = vector.load %arg1[%c0_7, %c0_8] : memref<12x12xf32, #tpu.memory_space<vmem>>, vector<12x12xf32>
    %c1 = arith.constant 1 : index
    %c0_9 = arith.constant 0 : index
    %c0_10 = arith.constant 0 : index
    %7 = vector.load %arg0[%c1, %c0_9, %c0_10] : memref<3x12x16xf32, #tpu.memory_space<vmem>>, vector<1x12x16xf32>
    %8 = vector.shape_cast %7 : vector<1x12x16xf32> to vector<12x16xf32>
    %cst_11 = arith.constant dense<0.000000e+00> : vector<12x16xf32>
    %9 = tpu.matmul %6, %8, %cst_11 {dimension_numbers = #tpu.dot_dimension_numbers<[1], [0], [0], [1], [0, 0, 1, 1], [], []>} : vector<12x12xf32>, vector<12x16xf32>, vector<12x16xf32> -> vector<12x16xf32>
    %c0_12 = arith.constant 0 : index
    %c0_13 = arith.constant 0 : index
    %10 = vector.load %arg2[%c0_12, %c0_13] : memref<16x12xf32, #tpu.memory_space<vmem>>, vector<16x12xf32>
    %cst_14 = arith.constant dense<0.000000e+00> : vector<12x12xf32>
    %11 = tpu.matmul %9, %10, %cst_14 {dimension_numbers = #tpu.dot_dimension_numbers<[1], [0], [0], [1], [0, 0, 1, 1], [], []>} : vector<12x16xf32>, vector<16x12xf32>, vector<12x12xf32> -> vector<12x12xf32>
    %c0_15 = arith.constant 0 : index
    %c0_16 = arith.constant 0 : index
    %12 = vector.load %arg1[%c0_15, %c0_16] : memref<12x12xf32, #tpu.memory_space<vmem>>, vector<12x12xf32>
    %c2 = arith.constant 2 : index
    %c0_17 = arith.constant 0 : index
    %c0_18 = arith.constant 0 : index
    %13 = vector.load %arg0[%c2, %c0_17, %c0_18] : memref<3x12x16xf32, #tpu.memory_space<vmem>>, vector<1x12x16xf32>
    %14 = vector.shape_cast %13 : vector<1x12x16xf32> to vector<12x16xf32>
    %cst_19 = arith.constant dense<0.000000e+00> : vector<12x16xf32>
    %15 = tpu.matmul %12, %14, %cst_19 {dimension_numbers = #tpu.dot_dimension_numbers<[1], [0], [0], [1], [0, 0, 1, 1], [], []>} : vector<12x12xf32>, vector<12x16xf32>, vector<12x16xf32> -> vector<12x16xf32>
    %c0_20 = arith.constant 0 : index
    %c0_21 = arith.constant 0 : index
    %16 = vector.load %arg2[%c0_20, %c0_21] : memref<16x12xf32, #tpu.memory_space<vmem>>, vector<16x12xf32>
    %cst_22 = arith.constant dense<0.000000e+00> : vector<12x12xf32>
    %17 = tpu.matmul %15, %16, %cst_22 {dimension_numbers = #tpu.dot_dimension_numbers<[1], [0], [0], [1], [0, 0, 1, 1], [], []>} : vector<12x16xf32>, vector<16x12xf32>, vector<12x12xf32> -> vector<12x12xf32>
    %c0_23 = arith.constant 0 : index
    %18 = memref.load %arg3[%c0_23] : memref<60xf32, #tpu.memory_space<smem>>
    %19 = vector.broadcast %18 : f32 to vector<12x12xf32>
    %20 = arith.mulf %19, %5 : vector<12x12xf32>
    %c20 = arith.constant 20 : index
    %21 = memref.load %arg3[%c20] : memref<60xf32, #tpu.memory_space<smem>>
    %22 = vector.broadcast %21 : f32 to vector<12x12xf32>
    %23 = arith.mulf %22, %11 : vector<12x12xf32>
    %24 = arith.addf %20, %23 : vector<12x12xf32>
    %c40 = arith.constant 40 : index
    %25 = memref.load %arg3[%c40] : memref<60xf32, #tpu.memory_space<smem>>
    %26 = vector.broadcast %25 : f32 to vector<12x12xf32>
    %27 = arith.mulf %26, %17 : vector<12x12xf32>
    %28 = arith.addf %24, %27 : vector<12x12xf32>
    %c0_24 = arith.constant 0 : index
    %29 = memref.load %arg4[%c0_24] : memref<20xf32, #tpu.memory_space<smem>>
    %30 = vector.broadcast %29 : f32 to vector<12x12xf32>
    %31 = arith.addf %28, %30 : vector<12x12xf32>
    %c0_25 = arith.constant 0 : index
    %c0_26 = arith.constant 0 : index
    %c0_27 = arith.constant 0 : index
    %32 = vector.load %arg5[%c0_25, %c0_26, %c0_27] : memref<20x12x12xf32, #tpu.memory_space<vmem>>, vector<1x12x12xf32>
    %33 = vector.shape_cast %32 : vector<1x12x12xf32> to vector<12x12xf32>
    %34 = vector.shape_cast %31 : vector<12x12xf32> to vector<1x12x12xf32>
    tpu.vector_store %arg5[%c0_25, %c0_26, %c0_27], %34 {strides = array<i32>} : memref<20x12x12xf32, #tpu.memory_space<vmem>>, vector<1x12x12xf32>,
    %c1_28 = arith.constant 1 : index
    %35 = memref.load %arg3[%c1_28] : memref<60xf32, #tpu.memory_space<smem>>
    %36 = vector.broadcast %35 : f32 to vector<12x12xf32>
    %37 = arith.mulf %36, %5 : vector<12x12xf32>
    %c21 = arith.constant 21 : index
    %38 = memref.load %arg3[%c21] : memref<60xf32, #tpu.memory_space<smem>>
    %39 = vector.broadcast %38 : f32 to vector<12x12xf32>
    %40 = arith.mulf %39, %11 : vector<12x12xf32>
    %41 = arith.addf %37, %40 : vector<12x12xf32>
    %c41 = arith.constant 41 : index
    %42 = memref.load %arg3[%c41] : memref<60xf32, #tpu.memory_space<smem>>
    %43 = vector.broadcast %42 : f32 to vector<12x12xf32>
    %44 = arith.mulf %43, %17 : vector<12x12xf32>
    %45 = arith.addf %41, %44 : vector<12x12xf32>
    %c1_29 = arith.constant 1 : index
    %46 = memref.load %arg4[%c1_29] : memref<20xf32, #tpu.memory_space<smem>>
    %47 = vector.broadcast %46 : f32 to vector<12x12xf32>
    %48 = arith.addf %45, %47 : vector<12x12xf32>
    %c1_30 = arith.constant 1 : index
    %c0_31 = arith.constant 0 : index
    %c0_32 = arith.constant 0 : index
    %49 = vector.load %arg5[%c1_30, %c0_31, %c0_32] : memref<20x12x12xf32, #tpu.memory_space<vmem>>, vector<1x12x12xf32>
    %50 = vector.shape_cast %49 : vector<1x12x12xf32> to vector<12x12xf32>
    %51 = vector.shape_cast %48 : vector<12x12xf32> to vector<1x12x12xf32>
    tpu.vector_store %arg5[%c1_30, %c0_31, %c0_32], %51 {strides = array<i32>} : memref<20x12x12xf32, #tpu.memory_space<vmem>>, vector<1x12x12xf32>,
    %c2_33 = arith.constant 2 : index
    %52 = memref.load %arg3[%c2_33] : memref<60xf32, #tpu.memory_space<smem>>
    %53 = vector.broadcast %52 : f32 to vector<12x12xf32>
    %54 = arith.mulf %53, %5 : vector<12x12xf32>
    %c22 = arith.constant 22 : index
    %55 = memref.load %arg3[%c22] : memref<60xf32, #tpu.memory_space<smem>>
    %56 = vector.broadcast %55 : f32 to vector<12x12xf32>
    %57 = arith.mulf %56, %11 : vector<12x12xf32>
    %58 = arith.addf %54, %57 : vector<12x12xf32>
    %c42 = arith.constant 42 : index
    %59 = memref.load %arg3[%c42] : memref<60xf32, #tpu.memory_space<smem>>
    %60 = vector.broadcast %59 : f32 to vector<12x12xf32>
    %61 = arith.mulf %60, %17 : vector<12x12xf32>
    %62 = arith.addf %58, %61 : vector<12x12xf32>
    %c2_34 = arith.constant 2 : index
    %63 = memref.load %arg4[%c2_34] : memref<20xf32, #tpu.memory_space<smem>>
    %64 = vector.broadcast %63 : f32 to vector<12x12xf32>
    %65 = arith.addf %62, %64 : vector<12x12xf32>
    %c2_35 = arith.constant 2 : index
    %c0_36 = arith.constant 0 : index
    %c0_37 = arith.constant 0 : index
    %66 = vector.load %arg5[%c2_35, %c0_36, %c0_37] : memref<20x12x12xf32, #tpu.memory_space<vmem>>, vector<1x12x12xf32>
    %67 = vector.shape_cast %66 : vector<1x12x12xf32> to vector<12x12xf32>
    %68 = vector.shape_cast %65 : vector<12x12xf32> to vector<1x12x12xf32>
    tpu.vector_store %arg5[%c2_35, %c0_36, %c0_37], %68 {strides = array<i32>} : memref<20x12x12xf32, #tpu.memory_space<vmem>>, vector<1x12x12xf32>,
    %c3 = arith.constant 3 : index
    %69 = memref.load %arg3[%c3] : memref<60xf32, #tpu.memory_space<smem>>
    %70 = vector.broadcast %69 : f32 to vector<12x12xf32>
    %71 = arith.mulf %70, %5 : vector<12x12xf32>
    %c23 = arith.constant 23 : index
    %72 = memref.load %arg3[%c23] : memref<60xf32, #tpu.memory_space<smem>>
    %73 = vector.broadcast %72 : f32 to vector<12x12xf32>
    %74 = arith.mulf %73, %11 : vector<12x12xf32>
    %75 = arith.addf %71, %74 : vector<12x12xf32>
    %c43 = arith.constant 43 : index
    %76 = memref.load %arg3[%c43] : memref<60xf32, #tpu.memory_space<smem>>
    %77 = vector.broadcast %76 : f32 to vector<12x12xf32>
    %78 = arith.mulf %77, %17 : vector<12x12xf32>
    %79 = arith.addf %75, %78 : vector<12x12xf32>
    %c3_38 = arith.constant 3 : index
    %80 = memref.load %arg4[%c3_38] : memref<20xf32, #tpu.memory_space<smem>>
    %81 = vector.broadcast %80 : f32 to vector<12x12xf32>
    %82 = arith.addf %79, %81 : vector<12x12xf32>
    %c3_39 = arith.constant 3 : index
    %c0_40 = arith.constant 0 : index
    %c0_41 = arith.constant 0 : index
    %83 = vector.load %arg5[%c3_39, %c0_40, %c0_41] : memref<20x12x12xf32, #tpu.memory_space<vmem>>, vector<1x12x12xf32>
    %84 = vector.shape_cast %83 : vector<1x12x12xf32> to vector<12x12xf32>
    %85 = vector.shape_cast %82 : vector<12x12xf32> to vector<1x12x12xf32>
    tpu.vector_store %arg5[%c3_39, %c0_40, %c0_41], %85 {strides = array<i32>} : memref<20x12x12xf32, #tpu.memory_space<vmem>>, vector<1x12x12xf32>,
    %c4 = arith.constant 4 : index
    %86 = memref.load %arg3[%c4] : memref<60xf32, #tpu.memory_space<smem>>
    %87 = vector.broadcast %86 : f32 to vector<12x12xf32>
    %88 = arith.mulf %87, %5 : vector<12x12xf32>
    %c24 = arith.constant 24 : index
    %89 = memref.load %arg3[%c24] : memref<60xf32, #tpu.memory_space<smem>>
    %90 = vector.broadcast %89 : f32 to vector<12x12xf32>
    %91 = arith.mulf %90, %11 : vector<12x12xf32>
    %92 = arith.addf %88, %91 : vector<12x12xf32>
    %c44 = arith.constant 44 : index
    %93 = memref.load %arg3[%c44] : memref<60xf32, #tpu.memory_space<smem>>
    %94 = vector.broadcast %93 : f32 to vector<12x12xf32>
    %95 = arith.mulf %94, %17 : vector<12x12xf32>
    %96 = arith.addf %92, %95 : vector<12x12xf32>
    %c4_42 = arith.constant 4 : index
    %97 = memref.load %arg4[%c4_42] : memref<20xf32, #tpu.memory_space<smem>>
    %98 = vector.broadcast %97 : f32 to vector<12x12xf32>
    %99 = arith.addf %96, %98 : vector<12x12xf32>
    %c4_43 = arith.constant 4 : index
    %c0_44 = arith.constant 0 : index
    %c0_45 = arith.constant 0 : index
    %100 = vector.load %arg5[%c4_43, %c0_44, %c0_45] : memref<20x12x12xf32, #tpu.memory_space<vmem>>, vector<1x12x12xf32>
    %101 = vector.shape_cast %100 : vector<1x12x12xf32> to vector<12x12xf32>
    %102 = vector.shape_cast %99 : vector<12x12xf32> to vector<1x12x12xf32>
    tpu.vector_store %arg5[%c4_43, %c0_44, %c0_45], %102 {strides = array<i32>} : memref<20x12x12xf32, #tpu.memory_space<vmem>>, vector<1x12x12xf32>,
    %c5 = arith.constant 5 : index
    %103 = memref.load %arg3[%c5] : memref<60xf32, #tpu.memory_space<smem>>
    %104 = vector.broadcast %103 : f32 to vector<12x12xf32>
    %105 = arith.mulf %104, %5 : vector<12x12xf32>
    %c25 = arith.constant 25 : index
    %106 = memref.load %arg3[%c25] : memref<60xf32, #tpu.memory_space<smem>>
    %107 = vector.broadcast %106 : f32 to vector<12x12xf32>
    %108 = arith.mulf %107, %11 : vector<12x12xf32>
    %109 = arith.addf %105, %108 : vector<12x12xf32>
    %c45 = arith.constant 45 : index
    %110 = memref.load %arg3[%c45] : memref<60xf32, #tpu.memory_space<smem>>
    %111 = vector.broadcast %110 : f32 to vector<12x12xf32>
    %112 = arith.mulf %111, %17 : vector<12x12xf32>
    %113 = arith.addf %109, %112 : vector<12x12xf32>
    %c5_46 = arith.constant 5 : index
    %114 = memref.load %arg4[%c5_46] : memref<20xf32, #tpu.memory_space<smem>>
    %115 = vector.broadcast %114 : f32 to vector<12x12xf32>
    %116 = arith.addf %113, %115 : vector<12x12xf32>
    %c5_47 = arith.constant 5 : index
    %c0_48 = arith.constant 0 : index
    %c0_49 = arith.constant 0 : index
    %117 = vector.load %arg5[%c5_47, %c0_48, %c0_49] : memref<20x12x12xf32, #tpu.memory_space<vmem>>, vector<1x12x12xf32>
    %118 = vector.shape_cast %117 : vector<1x12x12xf32> to vector<12x12xf32>
    %119 = vector.shape_cast %116 : vector<12x12xf32> to vector<1x12x12xf32>
    tpu.vector_store %arg5[%c5_47, %c0_48, %c0_49], %119 {strides = array<i32>} : memref<20x12x12xf32, #tpu.memory_space<vmem>>, vector<1x12x12xf32>,
    %c6 = arith.constant 6 : index
    %120 = memref.load %arg3[%c6] : memref<60xf32, #tpu.memory_space<smem>>
    %121 = vector.broadcast %120 : f32 to vector<12x12xf32>
    %122 = arith.mulf %121, %5 : vector<12x12xf32>
    %c26 = arith.constant 26 : index
    %123 = memref.load %arg3[%c26] : memref<60xf32, #tpu.memory_space<smem>>
    %124 = vector.broadcast %123 : f32 to vector<12x12xf32>
    %125 = arith.mulf %124, %11 : vector<12x12xf32>
    %126 = arith.addf %122, %125 : vector<12x12xf32>
    %c46 = arith.constant 46 : index
    %127 = memref.load %arg3[%c46] : memref<60xf32, #tpu.memory_space<smem>>
    %128 = vector.broadcast %127 : f32 to vector<12x12xf32>
    %129 = arith.mulf %128, %17 : vector<12x12xf32>
    %130 = arith.addf %126, %129 : vector<12x12xf32>
    %c6_50 = arith.constant 6 : index
    %131 = memref.load %arg4[%c6_50] : memref<20xf32, #tpu.memory_space<smem>>
    %132 = vector.broadcast %131 : f32 to vector<12x12xf32>
    %133 = arith.addf %130, %132 : vector<12x12xf32>
    %c6_51 = arith.constant 6 : index
    %c0_52 = arith.constant 0 : index
    %c0_53 = arith.constant 0 : index
    %134 = vector.load %arg5[%c6_51, %c0_52, %c0_53] : memref<20x12x12xf32, #tpu.memory_space<vmem>>, vector<1x12x12xf32>
    %135 = vector.shape_cast %134 : vector<1x12x12xf32> to vector<12x12xf32>
    %136 = vector.shape_cast %133 : vector<12x12xf32> to vector<1x12x12xf32>
    tpu.vector_store %arg5[%c6_51, %c0_52, %c0_53], %136 {strides = array<i32>} : memref<20x12x12xf32, #tpu.memory_space<vmem>>, vector<1x12x12xf32>,
    %c7 = arith.constant 7 : index
    %137 = memref.load %arg3[%c7] : memref<60xf32, #tpu.memory_space<smem>>
    %138 = vector.broadcast %137 : f32 to vector<12x12xf32>
    %139 = arith.mulf %138, %5 : vector<12x12xf32>
    %c27 = arith.constant 27 : index
    %140 = memref.load %arg3[%c27] : memref<60xf32, #tpu.memory_space<smem>>
    %141 = vector.broadcast %140 : f32 to vector<12x12xf32>
    %142 = arith.mulf %141, %11 : vector<12x12xf32>
    %143 = arith.addf %139, %142 : vector<12x12xf32>
    %c47 = arith.constant 47 : index
    %144 = memref.load %arg3[%c47] : memref<60xf32, #tpu.memory_space<smem>>
    %145 = vector.broadcast %144 : f32 to vector<12x12xf32>
    %146 = arith.mulf %145, %17 : vector<12x12xf32>
    %147 = arith.addf %143, %146 : vector<12x12xf32>
    %c7_54 = arith.constant 7 : index
    %148 = memref.load %arg4[%c7_54] : memref<20xf32, #tpu.memory_space<smem>>
    %149 = vector.broadcast %148 : f32 to vector<12x12xf32>
    %150 = arith.addf %147, %149 : vector<12x12xf32>
    %c7_55 = arith.constant 7 : index
    %c0_56 = arith.constant 0 : index
    %c0_57 = arith.constant 0 : index
    %151 = vector.load %arg5[%c7_55, %c0_56, %c0_57] : memref<20x12x12xf32, #tpu.memory_space<vmem>>, vector<1x12x12xf32>
    %152 = vector.shape_cast %151 : vector<1x12x12xf32> to vector<12x12xf32>
    %153 = vector.shape_cast %150 : vector<12x12xf32> to vector<1x12x12xf32>
    tpu.vector_store %arg5[%c7_55, %c0_56, %c0_57], %153 {strides = array<i32>} : memref<20x12x12xf32, #tpu.memory_space<vmem>>, vector<1x12x12xf32>,
    %c8 = arith.constant 8 : index
    %154 = memref.load %arg3[%c8] : memref<60xf32, #tpu.memory_space<smem>>
    %155 = vector.broadcast %154 : f32 to vector<12x12xf32>
    %156 = arith.mulf %155, %5 : vector<12x12xf32>
    %c28 = arith.constant 28 : index
    %157 = memref.load %arg3[%c28] : memref<60xf32, #tpu.memory_space<smem>>
    %158 = vector.broadcast %157 : f32 to vector<12x12xf32>
    %159 = arith.mulf %158, %11 : vector<12x12xf32>
    %160 = arith.addf %156, %159 : vector<12x12xf32>
    %c48 = arith.constant 48 : index
    %161 = memref.load %arg3[%c48] : memref<60xf32, #tpu.memory_space<smem>>
    %162 = vector.broadcast %161 : f32 to vector<12x12xf32>
    %163 = arith.mulf %162, %17 : vector<12x12xf32>
    %164 = arith.addf %160, %163 : vector<12x12xf32>
    %c8_58 = arith.constant 8 : index
    %165 = memref.load %arg4[%c8_58] : memref<20xf32, #tpu.memory_space<smem>>
    %166 = vector.broadcast %165 : f32 to vector<12x12xf32>
    %167 = arith.addf %164, %166 : vector<12x12xf32>
    %c8_59 = arith.constant 8 : index
    %c0_60 = arith.constant 0 : index
    %c0_61 = arith.constant 0 : index
    %168 = vector.load %arg5[%c8_59, %c0_60, %c0_61] : memref<20x12x12xf32, #tpu.memory_space<vmem>>, vector<1x12x12xf32>
    %169 = vector.shape_cast %168 : vector<1x12x12xf32> to vector<12x12xf32>
    %170 = vector.shape_cast %167 : vector<12x12xf32> to vector<1x12x12xf32>
    tpu.vector_store %arg5[%c8_59, %c0_60, %c0_61], %170 {strides = array<i32>} : memref<20x12x12xf32, #tpu.memory_space<vmem>>, vector<1x12x12xf32>,
    %c9 = arith.constant 9 : index
    %171 = memref.load %arg3[%c9] : memref<60xf32, #tpu.memory_space<smem>>
    %172 = vector.broadcast %171 : f32 to vector<12x12xf32>
    %173 = arith.mulf %172, %5 : vector<12x12xf32>
    %c29 = arith.constant 29 : index
    %174 = memref.load %arg3[%c29] : memref<60xf32, #tpu.memory_space<smem>>
    %175 = vector.broadcast %174 : f32 to vector<12x12xf32>
    %176 = arith.mulf %175, %11 : vector<12x12xf32>
    %177 = arith.addf %173, %176 : vector<12x12xf32>
    %c49 = arith.constant 49 : index
    %178 = memref.load %arg3[%c49] : memref<60xf32, #tpu.memory_space<smem>>
    %179 = vector.broadcast %178 : f32 to vector<12x12xf32>
    %180 = arith.mulf %179, %17 : vector<12x12xf32>
    %181 = arith.addf %177, %180 : vector<12x12xf32>
    %c9_62 = arith.constant 9 : index
    %182 = memref.load %arg4[%c9_62] : memref<20xf32, #tpu.memory_space<smem>>
    %183 = vector.broadcast %182 : f32 to vector<12x12xf32>
    %184 = arith.addf %181, %183 : vector<12x12xf32>
    %c9_63 = arith.constant 9 : index
    %c0_64 = arith.constant 0 : index
    %c0_65 = arith.constant 0 : index
    %185 = vector.load %arg5[%c9_63, %c0_64, %c0_65] : memref<20x12x12xf32, #tpu.memory_space<vmem>>, vector<1x12x12xf32>
    %186 = vector.shape_cast %185 : vector<1x12x12xf32> to vector<12x12xf32>
    %187 = vector.shape_cast %184 : vector<12x12xf32> to vector<1x12x12xf32>
    tpu.vector_store %arg5[%c9_63, %c0_64, %c0_65], %187 {strides = array<i32>} : memref<20x12x12xf32, #tpu.memory_space<vmem>>, vector<1x12x12xf32>,
    %c10 = arith.constant 10 : index
    %188 = memref.load %arg3[%c10] : memref<60xf32, #tpu.memory_space<smem>>
    %189 = vector.broadcast %188 : f32 to vector<12x12xf32>
    %190 = arith.mulf %189, %5 : vector<12x12xf32>
    %c30 = arith.constant 30 : index
    %191 = memref.load %arg3[%c30] : memref<60xf32, #tpu.memory_space<smem>>
    %192 = vector.broadcast %191 : f32 to vector<12x12xf32>
    %193 = arith.mulf %192, %11 : vector<12x12xf32>
    %194 = arith.addf %190, %193 : vector<12x12xf32>
    %c50 = arith.constant 50 : index
    %195 = memref.load %arg3[%c50] : memref<60xf32, #tpu.memory_space<smem>>
    %196 = vector.broadcast %195 : f32 to vector<12x12xf32>
    %197 = arith.mulf %196, %17 : vector<12x12xf32>
    %198 = arith.addf %194, %197 : vector<12x12xf32>
    %c10_66 = arith.constant 10 : index
    %199 = memref.load %arg4[%c10_66] : memref<20xf32, #tpu.memory_space<smem>>
    %200 = vector.broadcast %199 : f32 to vector<12x12xf32>
    %201 = arith.addf %198, %200 : vector<12x12xf32>
    %c10_67 = arith.constant 10 : index
    %c0_68 = arith.constant 0 : index
    %c0_69 = arith.constant 0 : index
    %202 = vector.load %arg5[%c10_67, %c0_68, %c0_69] : memref<20x12x12xf32, #tpu.memory_space<vmem>>, vector<1x12x12xf32>
    %203 = vector.shape_cast %202 : vector<1x12x12xf32> to vector<12x12xf32>
    %204 = vector.shape_cast %201 : vector<12x12xf32> to vector<1x12x12xf32>
    tpu.vector_store %arg5[%c10_67, %c0_68, %c0_69], %204 {strides = array<i32>} : memref<20x12x12xf32, #tpu.memory_space<vmem>>, vector<1x12x12xf32>,
    %c11 = arith.constant 11 : index
    %205 = memref.load %arg3[%c11] : memref<60xf32, #tpu.memory_space<smem>>
    %206 = vector.broadcast %205 : f32 to vector<12x12xf32>
    %207 = arith.mulf %206, %5 : vector<12x12xf32>
    %c31 = arith.constant 31 : index
    %208 = memref.load %arg3[%c31] : memref<60xf32, #tpu.memory_space<smem>>
    %209 = vector.broadcast %208 : f32 to vector<12x12xf32>
    %210 = arith.mulf %209, %11 : vector<12x12xf32>
    %211 = arith.addf %207, %210 : vector<12x12xf32>
    %c51 = arith.constant 51 : index
    %212 = memref.load %arg3[%c51] : memref<60xf32, #tpu.memory_space<smem>>
    %213 = vector.broadcast %212 : f32 to vector<12x12xf32>
    %214 = arith.mulf %213, %17 : vector<12x12xf32>
    %215 = arith.addf %211, %214 : vector<12x12xf32>
    %c11_70 = arith.constant 11 : index
    %216 = memref.load %arg4[%c11_70] : memref<20xf32, #tpu.memory_space<smem>>
    %217 = vector.broadcast %216 : f32 to vector<12x12xf32>
    %218 = arith.addf %215, %217 : vector<12x12xf32>
    %c11_71 = arith.constant 11 : index
    %c0_72 = arith.constant 0 : index
    %c0_73 = arith.constant 0 : index
    %219 = vector.load %arg5[%c11_71, %c0_72, %c0_73] : memref<20x12x12xf32, #tpu.memory_space<vmem>>, vector<1x12x12xf32>
    %220 = vector.shape_cast %219 : vector<1x12x12xf32> to vector<12x12xf32>
    %221 = vector.shape_cast %218 : vector<12x12xf32> to vector<1x12x12xf32>
    tpu.vector_store %arg5[%c11_71, %c0_72, %c0_73], %221 {strides = array<i32>} : memref<20x12x12xf32, #tpu.memory_space<vmem>>, vector<1x12x12xf32>,
    %c12 = arith.constant 12 : index
    %222 = memref.load %arg3[%c12] : memref<60xf32, #tpu.memory_space<smem>>
    %223 = vector.broadcast %222 : f32 to vector<12x12xf32>
    %224 = arith.mulf %223, %5 : vector<12x12xf32>
    %c32 = arith.constant 32 : index
    %225 = memref.load %arg3[%c32] : memref<60xf32, #tpu.memory_space<smem>>
    %226 = vector.broadcast %225 : f32 to vector<12x12xf32>
    %227 = arith.mulf %226, %11 : vector<12x12xf32>
    %228 = arith.addf %224, %227 : vector<12x12xf32>
    %c52 = arith.constant 52 : index
    %229 = memref.load %arg3[%c52] : memref<60xf32, #tpu.memory_space<smem>>
    %230 = vector.broadcast %229 : f32 to vector<12x12xf32>
    %231 = arith.mulf %230, %17 : vector<12x12xf32>
    %232 = arith.addf %228, %231 : vector<12x12xf32>
    %c12_74 = arith.constant 12 : index
    %233 = memref.load %arg4[%c12_74] : memref<20xf32, #tpu.memory_space<smem>>
    %234 = vector.broadcast %233 : f32 to vector<12x12xf32>
    %235 = arith.addf %232, %234 : vector<12x12xf32>
    %c12_75 = arith.constant 12 : index
    %c0_76 = arith.constant 0 : index
    %c0_77 = arith.constant 0 : index
    %236 = vector.load %arg5[%c12_75, %c0_76, %c0_77] : memref<20x12x12xf32, #tpu.memory_space<vmem>>, vector<1x12x12xf32>
    %237 = vector.shape_cast %236 : vector<1x12x12xf32> to vector<12x12xf32>
    %238 = vector.shape_cast %235 : vector<12x12xf32> to vector<1x12x12xf32>
    tpu.vector_store %arg5[%c12_75, %c0_76, %c0_77], %238 {strides = array<i32>} : memref<20x12x12xf32, #tpu.memory_space<vmem>>, vector<1x12x12xf32>,
    %c13 = arith.constant 13 : index
    %239 = memref.load %arg3[%c13] : memref<60xf32, #tpu.memory_space<smem>>
    %240 = vector.broadcast %239 : f32 to vector<12x12xf32>
    %241 = arith.mulf %240, %5 : vector<12x12xf32>
    %c33 = arith.constant 33 : index
    %242 = memref.load %arg3[%c33] : memref<60xf32, #tpu.memory_space<smem>>
    %243 = vector.broadcast %242 : f32 to vector<12x12xf32>
    %244 = arith.mulf %243, %11 : vector<12x12xf32>
    %245 = arith.addf %241, %244 : vector<12x12xf32>
    %c53 = arith.constant 53 : index
    %246 = memref.load %arg3[%c53] : memref<60xf32, #tpu.memory_space<smem>>
    %247 = vector.broadcast %246 : f32 to vector<12x12xf32>
    %248 = arith.mulf %247, %17 : vector<12x12xf32>
    %249 = arith.addf %245, %248 : vector<12x12xf32>
    %c13_78 = arith.constant 13 : index
    %250 = memref.load %arg4[%c13_78] : memref<20xf32, #tpu.memory_space<smem>>
    %251 = vector.broadcast %250 : f32 to vector<12x12xf32>
    %252 = arith.addf %249, %251 : vector<12x12xf32>
    %c13_79 = arith.constant 13 : index
    %c0_80 = arith.constant 0 : index
    %c0_81 = arith.constant 0 : index
    %253 = vector.load %arg5[%c13_79, %c0_80, %c0_81] : memref<20x12x12xf32, #tpu.memory_space<vmem>>, vector<1x12x12xf32>
    %254 = vector.shape_cast %253 : vector<1x12x12xf32> to vector<12x12xf32>
    %255 = vector.shape_cast %252 : vector<12x12xf32> to vector<1x12x12xf32>
    tpu.vector_store %arg5[%c13_79, %c0_80, %c0_81], %255 {strides = array<i32>} : memref<20x12x12xf32, #tpu.memory_space<vmem>>, vector<1x12x12xf32>,
    %c14 = arith.constant 14 : index
    %256 = memref.load %arg3[%c14] : memref<60xf32, #tpu.memory_space<smem>>
    %257 = vector.broadcast %256 : f32 to vector<12x12xf32>
    %258 = arith.mulf %257, %5 : vector<12x12xf32>
    %c34 = arith.constant 34 : index
    %259 = memref.load %arg3[%c34] : memref<60xf32, #tpu.memory_space<smem>>
    %260 = vector.broadcast %259 : f32 to vector<12x12xf32>
    %261 = arith.mulf %260, %11 : vector<12x12xf32>
    %262 = arith.addf %258, %261 : vector<12x12xf32>
    %c54 = arith.constant 54 : index
    %263 = memref.load %arg3[%c54] : memref<60xf32, #tpu.memory_space<smem>>
    %264 = vector.broadcast %263 : f32 to vector<12x12xf32>
    %265 = arith.mulf %264, %17 : vector<12x12xf32>
    %266 = arith.addf %262, %265 : vector<12x12xf32>
    %c14_82 = arith.constant 14 : index
    %267 = memref.load %arg4[%c14_82] : memref<20xf32, #tpu.memory_space<smem>>
    %268 = vector.broadcast %267 : f32 to vector<12x12xf32>
    %269 = arith.addf %266, %268 : vector<12x12xf32>
    %c14_83 = arith.constant 14 : index
    %c0_84 = arith.constant 0 : index
    %c0_85 = arith.constant 0 : index
    %270 = vector.load %arg5[%c14_83, %c0_84, %c0_85] : memref<20x12x12xf32, #tpu.memory_space<vmem>>, vector<1x12x12xf32>
    %271 = vector.shape_cast %270 : vector<1x12x12xf32> to vector<12x12xf32>
    %272 = vector.shape_cast %269 : vector<12x12xf32> to vector<1x12x12xf32>
    tpu.vector_store %arg5[%c14_83, %c0_84, %c0_85], %272 {strides = array<i32>} : memref<20x12x12xf32, #tpu.memory_space<vmem>>, vector<1x12x12xf32>,
    %c15 = arith.constant 15 : index
    %273 = memref.load %arg3[%c15] : memref<60xf32, #tpu.memory_space<smem>>
    %274 = vector.broadcast %273 : f32 to vector<12x12xf32>
    %275 = arith.mulf %274, %5 : vector<12x12xf32>
    %c35 = arith.constant 35 : index
    %276 = memref.load %arg3[%c35] : memref<60xf32, #tpu.memory_space<smem>>
    %277 = vector.broadcast %276 : f32 to vector<12x12xf32>
    %278 = arith.mulf %277, %11 : vector<12x12xf32>
    %279 = arith.addf %275, %278 : vector<12x12xf32>
    %c55 = arith.constant 55 : index
    %280 = memref.load %arg3[%c55] : memref<60xf32, #tpu.memory_space<smem>>
    %281 = vector.broadcast %280 : f32 to vector<12x12xf32>
    %282 = arith.mulf %281, %17 : vector<12x12xf32>
    %283 = arith.addf %279, %282 : vector<12x12xf32>
    %c15_86 = arith.constant 15 : index
    %284 = memref.load %arg4[%c15_86] : memref<20xf32, #tpu.memory_space<smem>>
    %285 = vector.broadcast %284 : f32 to vector<12x12xf32>
    %286 = arith.addf %283, %285 : vector<12x12xf32>
    %c15_87 = arith.constant 15 : index
    %c0_88 = arith.constant 0 : index
    %c0_89 = arith.constant 0 : index
    %287 = vector.load %arg5[%c15_87, %c0_88, %c0_89] : memref<20x12x12xf32, #tpu.memory_space<vmem>>, vector<1x12x12xf32>
    %288 = vector.shape_cast %287 : vector<1x12x12xf32> to vector<12x12xf32>
    %289 = vector.shape_cast %286 : vector<12x12xf32> to vector<1x12x12xf32>
    tpu.vector_store %arg5[%c15_87, %c0_88, %c0_89], %289 {strides = array<i32>} : memref<20x12x12xf32, #tpu.memory_space<vmem>>, vector<1x12x12xf32>,
    %c16 = arith.constant 16 : index
    %290 = memref.load %arg3[%c16] : memref<60xf32, #tpu.memory_space<smem>>
    %291 = vector.broadcast %290 : f32 to vector<12x12xf32>
    %292 = arith.mulf %291, %5 : vector<12x12xf32>
    %c36 = arith.constant 36 : index
    %293 = memref.load %arg3[%c36] : memref<60xf32, #tpu.memory_space<smem>>
    %294 = vector.broadcast %293 : f32 to vector<12x12xf32>
    %295 = arith.mulf %294, %11 : vector<12x12xf32>
    %296 = arith.addf %292, %295 : vector<12x12xf32>
    %c56 = arith.constant 56 : index
    %297 = memref.load %arg3[%c56] : memref<60xf32, #tpu.memory_space<smem>>
    %298 = vector.broadcast %297 : f32 to vector<12x12xf32>
    %299 = arith.mulf %298, %17 : vector<12x12xf32>
    %300 = arith.addf %296, %299 : vector<12x12xf32>
    %c16_90 = arith.constant 16 : index
    %301 = memref.load %arg4[%c16_90] : memref<20xf32, #tpu.memory_space<smem>>
    %302 = vector.broadcast %301 : f32 to vector<12x12xf32>
    %303 = arith.addf %300, %302 : vector<12x12xf32>
    %c16_91 = arith.constant 16 : index
    %c0_92 = arith.constant 0 : index
    %c0_93 = arith.constant 0 : index
    %304 = vector.load %arg5[%c16_91, %c0_92, %c0_93] : memref<20x12x12xf32, #tpu.memory_space<vmem>>, vector<1x12x12xf32>
    %305 = vector.shape_cast %304 : vector<1x12x12xf32> to vector<12x12xf32>
    %306 = vector.shape_cast %303 : vector<12x12xf32> to vector<1x12x12xf32>
    tpu.vector_store %arg5[%c16_91, %c0_92, %c0_93], %306 {strides = array<i32>} : memref<20x12x12xf32, #tpu.memory_space<vmem>>, vector<1x12x12xf32>,
    %c17 = arith.constant 17 : index
    %307 = memref.load %arg3[%c17] : memref<60xf32, #tpu.memory_space<smem>>
    %308 = vector.broadcast %307 : f32 to vector<12x12xf32>
    %309 = arith.mulf %308, %5 : vector<12x12xf32>
    %c37 = arith.constant 37 : index
    %310 = memref.load %arg3[%c37] : memref<60xf32, #tpu.memory_space<smem>>
    %311 = vector.broadcast %310 : f32 to vector<12x12xf32>
    %312 = arith.mulf %311, %11 : vector<12x12xf32>
    %313 = arith.addf %309, %312 : vector<12x12xf32>
    %c57 = arith.constant 57 : index
    %314 = memref.load %arg3[%c57] : memref<60xf32, #tpu.memory_space<smem>>
    %315 = vector.broadcast %314 : f32 to vector<12x12xf32>
    %316 = arith.mulf %315, %17 : vector<12x12xf32>
    %317 = arith.addf %313, %316 : vector<12x12xf32>
    %c17_94 = arith.constant 17 : index
    %318 = memref.load %arg4[%c17_94] : memref<20xf32, #tpu.memory_space<smem>>
    %319 = vector.broadcast %318 : f32 to vector<12x12xf32>
    %320 = arith.addf %317, %319 : vector<12x12xf32>
    %c17_95 = arith.constant 17 : index
    %c0_96 = arith.constant 0 : index
    %c0_97 = arith.constant 0 : index
    %321 = vector.load %arg5[%c17_95, %c0_96, %c0_97] : memref<20x12x12xf32, #tpu.memory_space<vmem>>, vector<1x12x12xf32>
    %322 = vector.shape_cast %321 : vector<1x12x12xf32> to vector<12x12xf32>
    %323 = vector.shape_cast %320 : vector<12x12xf32> to vector<1x12x12xf32>
    tpu.vector_store %arg5[%c17_95, %c0_96, %c0_97], %323 {strides = array<i32>} : memref<20x12x12xf32, #tpu.memory_space<vmem>>, vector<1x12x12xf32>,
    %c18 = arith.constant 18 : index
    %324 = memref.load %arg3[%c18] : memref<60xf32, #tpu.memory_space<smem>>
    %325 = vector.broadcast %324 : f32 to vector<12x12xf32>
    %326 = arith.mulf %325, %5 : vector<12x12xf32>
    %c38 = arith.constant 38 : index
    %327 = memref.load %arg3[%c38] : memref<60xf32, #tpu.memory_space<smem>>
    %328 = vector.broadcast %327 : f32 to vector<12x12xf32>
    %329 = arith.mulf %328, %11 : vector<12x12xf32>
    %330 = arith.addf %326, %329 : vector<12x12xf32>
    %c58 = arith.constant 58 : index
    %331 = memref.load %arg3[%c58] : memref<60xf32, #tpu.memory_space<smem>>
    %332 = vector.broadcast %331 : f32 to vector<12x12xf32>
    %333 = arith.mulf %332, %17 : vector<12x12xf32>
    %334 = arith.addf %330, %333 : vector<12x12xf32>
    %c18_98 = arith.constant 18 : index
    %335 = memref.load %arg4[%c18_98] : memref<20xf32, #tpu.memory_space<smem>>
    %336 = vector.broadcast %335 : f32 to vector<12x12xf32>
    %337 = arith.addf %334, %336 : vector<12x12xf32>
    %c18_99 = arith.constant 18 : index
    %c0_100 = arith.constant 0 : index
    %c0_101 = arith.constant 0 : index
    %338 = vector.load %arg5[%c18_99, %c0_100, %c0_101] : memref<20x12x12xf32, #tpu.memory_space<vmem>>, vector<1x12x12xf32>
    %339 = vector.shape_cast %338 : vector<1x12x12xf32> to vector<12x12xf32>
    %340 = vector.shape_cast %337 : vector<12x12xf32> to vector<1x12x12xf32>
    tpu.vector_store %arg5[%c18_99, %c0_100, %c0_101], %340 {strides = array<i32>} : memref<20x12x12xf32, #tpu.memory_space<vmem>>, vector<1x12x12xf32>,
    %c19 = arith.constant 19 : index
    %341 = memref.load %arg3[%c19] : memref<60xf32, #tpu.memory_space<smem>>
    %342 = vector.broadcast %341 : f32 to vector<12x12xf32>
    %343 = arith.mulf %342, %5 : vector<12x12xf32>
    %c39 = arith.constant 39 : index
    %344 = memref.load %arg3[%c39] : memref<60xf32, #tpu.memory_space<smem>>
    %345 = vector.broadcast %344 : f32 to vector<12x12xf32>
    %346 = arith.mulf %345, %11 : vector<12x12xf32>
    %347 = arith.addf %343, %346 : vector<12x12xf32>
    %c59 = arith.constant 59 : index
    %348 = memref.load %arg3[%c59] : memref<60xf32, #tpu.memory_space<smem>>
    %349 = vector.broadcast %348 : f32 to vector<12x12xf32>
    %350 = arith.mulf %349, %17 : vector<12x12xf32>
    %351 = arith.addf %347, %350 : vector<12x12xf32>
    %c19_102 = arith.constant 19 : index
    %352 = memref.load %arg4[%c19_102] : memref<20xf32, #tpu.memory_space<smem>>
    %353 = vector.broadcast %352 : f32 to vector<12x12xf32>
    %354 = arith.addf %351, %353 : vector<12x12xf32>
    %c19_103 = arith.constant 19 : index
    %c0_104 = arith.constant 0 : index
    %c0_105 = arith.constant 0 : index
    %355 = vector.load %arg5[%c19_103, %c0_104, %c0_105] : memref<20x12x12xf32, #tpu.memory_space<vmem>>, vector<1x12x12xf32>
    %356 = vector.shape_cast %355 : vector<1x12x12xf32> to vector<12x12xf32>
    %357 = vector.shape_cast %354 : vector<12x12xf32> to vector<1x12x12xf32>
    tpu.vector_store %arg5[%c19_103, %c0_104, %c0_105], %357 {strides = array<i32>} : memref<20x12x12xf32, #tpu.memory_space<vmem>>, vector<1x12x12xf32>,
    return
  }
}

</mosaic_0001>

<llo_original>
// kernel: object_in_hand_forward.3
$region0: #{object_in_hand_forward.3}
  #allocation0 [shape = 'u32[]', space=smem, size = 0x4, offset = 0x4, fixed_abs, tag = 'smem constant byte address 0x4 - core index']
  #allocation1 [shape = 'u32[144,128]{1,0:T(1,128)}', space=vmem, size = 0x12000, scoped, tag = 'internal scratch']
  #allocation2 [shape = 'f32[12,16]{1,0:T(8,128)}', space=vmem, size = 0x2000, scoped, tag = 'scratch operand']
  #allocation3 [shape = 's32[12,16]{1,0:T(8,128)}', space=vmem, size = 0x2000, scoped, tag = 'scratch operand']
  %s0 = inlined_call_operand.vmem [shape: f32[20,12,12], index: 0, kind: input, shape index: {}]
  %s1 = inlined_call_operand.vmem [shape: f32[12,12], index: 1, kind: input, shape index: {}]
  %s2 = inlined_call_operand.vmem [shape: f32[12,16], index: 2, kind: input, shape index: {}]
  %s3 = inlined_call_operand.vmem [shape: f32[3,12,16], index: 3, kind: input, shape index: {}]
  %s4 = inlined_call_operand.vmem [shape: f32[5], index: 4, kind: input, shape index: {}]
  %s5 = inlined_call_operand.vmem [shape: s32[12,16], index: 5, kind: output, shape index: {0}]
  %s6 = inlined_call_operand.vmem [shape: s32[12,16], index: 6, kind: output, shape index: {1}]
  %7 = xla_tuple %s5, %s6
  %s8 = sld [smem:[#allocation0]]
  $region73: #{object_in_hand_forward.3} parent=0
    _
  %s10 = ssub.s32 1, %s8
  %s11 = scalar_select 0, %s10, %s8
  $region1: #{object_in_hand_forward.3} parent=0
    #allocation4 [shape = 'u8[512]{0}', space=smem, size = 0x200, scoped, tag = 'input window, operand 4, single buffered']
    #allocation5 [shape = 's32[2]{0}', space=sflag, size = 0x8, scoped, tag = 'scoped memory for object_in_hand_forward.3']
    %12 = vsyncpa [#allocation5], 0
    loop: start=0, step=1, limit=22
    $region2: #{object_in_hand_forward.3} parent=1 // loop_pre_header
      _
    $region3: #{object_in_hand_forward.3} parent=1 // loop_header
      %s14 = sphi 0, %s18
      %p15 = scmp.ge.s32.totalorder %s14, 22
      %s24 = sphi 0, %s26
      %s27 = sphi 0, %s24
      %s28 = sphi 0, %s27
      %s44 = sphi 0, %s28
      %s48 = sphi 0, %s48
      %s50 = sphi 0, %s48
      %s51 = sphi 0, %s50
      %s65 = sphi 0, %s51
      %s69 = sphi 0, %s69
      %s71 = sphi 0, %s69
      %s72 = sphi 0, %s71
      %s86 = sphi 0, %s72
      %s90 = sphi 0, %s90
      %s92 = sphi 0, %s90
      %s93 = sphi 0, %s92
      %s107 = sphi 0, %s93
      %s111 = sphi 0, %s111
      %s113 = sphi 0, %s111
      %s114 = sphi 0, %s113
      %s128 = sphi 0, %s114
      %s132 = sphi 0, %s132
      %s134 = sphi 0, %s132
      %s135 = sphi 0, %s134
      %s149 = sphi 0, %s135
      %s153 = sphi 0, %s153
      %s155 = sphi 0, %s153
      %s156 = sphi 0, %s155
      %s170 = sphi 0, %s156
    $region4: #{object_in_hand_forward.3} parent=1 // loop_header_branch
      %17 = sbr.rel (%p15) target = $region8
    $region5: #{object_in_hand_forward.3} parent=1 // loop_body
      %s19 = ssub.s32 %s14, 1
      %s20 = ssub.s32 %s14, 2
      %s21 = sadd.s32 %s14, 1
      %s22 = ssub.s32 %s14, %s21
      %p23 = scmp.eq.s32.totalorder %s22, 0
      %s25 = sadd.s32 %s24, 1
      %s26 = scalar_select %p23, %s24, %s25
      %p29 = pneg %p23
      %p30 = scmp.eq.s32.totalorder %s14, 19
      %p31 = por %p29, %p30
      %p32 = scmp.ne.s32.totalorder %s24, %s27
      %p33 = scmp.eq.s32.totalorder %s14, 0
      %p34 = por %p32, %p33
      %p35 = scmp.ne.s32.totalorder %s24, %s27
      %p36 = scmp.eq.s32.totalorder %s19, 19
      %p37 = por %p35, %p36
      %p38 = scmp.ne.s32.totalorder %s27, %s28
      %p39 = scmp.eq.s32.totalorder %s19, 0
      %p40 = por %p38, %p39
      %p41 = scmp.ne.s32.totalorder %s27, %s28
      %p42 = scmp.eq.s32.totalorder %s20, 19
      %p43 = por %p41, %p42
      %p45 = scmp.ne.s32.totalorder %s28, %s44
      %p46 = scmp.eq.s32.totalorder %s20, 0
      %p47 = por %p45, %p46
      %s49 = sadd.s32 %s48, 1
      %p52 = scmp.eq.s32.totalorder %s14, 19
      %p53 = scmp.ne.s32.totalorder %s48, %s50
      %p54 = scmp.eq.s32.totalorder %s14, 0
      %p55 = por %p53, %p54
      %p56 = scmp.ne.s32.totalorder %s48, %s50
      %p57 = scmp.eq.s32.totalorder %s19, 19
      %p58 = por %p56, %p57
      %p59 = scmp.ne.s32.totalorder %s50, %s51
      %p60 = scmp.eq.s32.totalorder %s19, 0
      %p61 = por %p59, %p60
      %p62 = scmp.ne.s32.totalorder %s50, %s51
      %p63 = scmp.eq.s32.totalorder %s20, 19
      %p64 = por %p62, %p63
      %p66 = scmp.ne.s32.totalorder %s51, %s65
      %p67 = scmp.eq.s32.totalorder %s20, 0
      %p68 = por %p66, %p67
      %s70 = sadd.s32 %s69, 1
      %p73 = scmp.eq.s32.totalorder %s14, 19
      %p74 = scmp.ne.s32.totalorder %s69, %s71
      %p75 = scmp.eq.s32.totalorder %s14, 0
      %p76 = por %p74, %p75
      %p77 = scmp.ne.s32.totalorder %s69, %s71
      %p78 = scmp.eq.s32.totalorder %s19, 19
      %p79 = por %p77, %p78
      %p80 = scmp.ne.s32.totalorder %s71, %s72
      %p81 = scmp.eq.s32.totalorder %s19, 0
      %p82 = por %p80, %p81
      %p83 = scmp.ne.s32.totalorder %s71, %s72
      %p84 = scmp.eq.s32.totalorder %s20, 19
      %p85 = por %p83, %p84
      %p87 = scmp.ne.s32.totalorder %s72, %s86
      %p88 = scmp.eq.s32.totalorder %s20, 0
      %p89 = por %p87, %p88
      %s91 = sadd.s32 %s90, 1
      %p94 = scmp.eq.s32.totalorder %s14, 19
      %p95 = scmp.ne.s32.totalorder %s90, %s92
      %p96 = scmp.eq.s32.totalorder %s14, 0
      %p97 = por %p95, %p96
      %p98 = scmp.ne.s32.totalorder %s90, %s92
      %p99 = scmp.eq.s32.totalorder %s19, 19
      %p100 = por %p98, %p99
      %p101 = scmp.ne.s32.totalorder %s92, %s93
      %p102 = scmp.eq.s32.totalorder %s19, 0
      %p103 = por %p101, %p102
      %p104 = scmp.ne.s32.totalorder %s92, %s93
      %p105 = scmp.eq.s32.totalorder %s20, 19
      %p106 = por %p104, %p105
      %p108 = scmp.ne.s32.totalorder %s93, %s107
      %p109 = scmp.eq.s32.totalorder %s20, 0
      %p110 = por %p108, %p109
      %s112 = sadd.s32 %s111, 1
      %p115 = scmp.eq.s32.totalorder %s14, 19
      %p116 = scmp.ne.s32.totalorder %s111, %s113
      %p117 = scmp.eq.s32.totalorder %s14, 0
      %p118 = por %p116, %p117
      %p119 = scmp.ne.s32.totalorder %s111, %s113
      %p120 = scmp.eq.s32.totalorder %s19, 19
      %p121 = por %p119, %p120
      %p122 = scmp.ne.s32.totalorder %s113, %s114
      %p123 = scmp.eq.s32.totalorder %s19, 0
      %p124 = por %p122, %p123
      %p125 = scmp.ne.s32.totalorder %s113, %s114
      %p126 = scmp.eq.s32.totalorder %s20, 19
      %p127 = por %p125, %p126
      %p129 = scmp.ne.s32.totalorder %s114, %s128
      %p130 = scmp.eq.s32.totalorder %s20, 0
      %p131 = por %p129, %p130
      %s133 = sadd.s32 %s132, 1
      %p136 = scmp.eq.s32.totalorder %s14, 19
      %p137 = scmp.ne.s32.totalorder %s132, %s134
      %p138 = scmp.eq.s32.totalorder %s14, 0
      %p139 = por %p137, %p138
      %p140 = scmp.ne.s32.totalorder %s132, %s134
      %p141 = scmp.eq.s32.totalorder %s19, 19
      %p142 = por %p140, %p141
      %p143 = scmp.ne.s32.totalorder %s134, %s135
      %p144 = scmp.eq.s32.totalorder %s19, 0
      %p145 = por %p143, %p144
      %p146 = scmp.ne.s32.totalorder %s134, %s135
      %p147 = scmp.eq.s32.totalorder %s20, 19
      %p148 = por %p146, %p147
      %p150 = scmp.ne.s32.totalorder %s135, %s149
      %p151 = scmp.eq.s32.totalorder %s20, 0
      %p152 = por %p150, %p151
      %s154 = sadd.s32 %s153, 1
      %p157 = scmp.eq.s32.totalorder %s14, 19
      %p158 = scmp.ne.s32.totalorder %s153, %s155
      %p159 = scmp.eq.s32.totalorder %s14, 0
      %p160 = por %p158, %p159
      %p161 = scmp.ne.s32.totalorder %s153, %s155
      %p162 = scmp.eq.s32.totalorder %s19, 19
      %p163 = por %p161, %p162
      %p164 = scmp.ne.s32.totalorder %s155, %s156
      %p165 = scmp.eq.s32.totalorder %s19, 0
      %p166 = por %p164, %p165
      %p167 = scmp.ne.s32.totalorder %s155, %s156
      %p168 = scmp.eq.s32.totalorder %s20, 19
      %p169 = por %p167, %p168
      %p171 = scmp.ne.s32.totalorder %s156, %s170
      %p172 = scmp.eq.s32.totalorder %s20, 0
      %p173 = por %p171, %p172
      %p174 = scmp.le.s32.totalorder 1, %s14
      %p175 = scmp.lt.s32.totalorder %s14, 21
      %p176 = pnand %p174, %p175
      %p177 = pneg %p176
      // Predicated region
      $region9: #{object_in_hand_forward.3} parent=5 // pred_check
        _
      $region10: #{object_in_hand_forward.3} parent=5 // pred_check_branch
        %179 = sbr.rel (%p176) target = $region12
      $region11: #{object_in_hand_forward.3} parent=5 // pred_region
        %s180 = ssub.s32 %s14, 1
        // Predicated region
        $region13: #{object_in_hand_forward.3} parent=11 // pred_check
          %p181 = pneg %p61
        $region14: #{object_in_hand_forward.3} parent=11 // pred_check_branch
          %183 = sbr.rel (%p181) target = $region16
        $region15: #{object_in_hand_forward.3} parent=11 // pred_region
          _
        $region16: #{object_in_hand_forward.3} parent=11 // pred_fallthru
          _
        // Predicated region
        $region17: #{object_in_hand_forward.3} parent=11 // pred_check
          %p184 = pneg %p82
        $region18: #{object_in_hand_forward.3} parent=11 // pred_check_branch
          %186 = sbr.rel (%p184) target = $region20
        $region19: #{object_in_hand_forward.3} parent=11 // pred_region
          _
        $region20: #{object_in_hand_forward.3} parent=11 // pred_fallthru
          _
        // Predicated region
        $region21: #{object_in_hand_forward.3} parent=11 // pred_check
          %p187 = pneg %p103
        $region22: #{object_in_hand_forward.3} parent=11 // pred_check_branch
          %189 = sbr.rel (%p187) target = $region24
        $region23: #{object_in_hand_forward.3} parent=11 // pred_region
          _
        $region24: #{object_in_hand_forward.3} parent=11 // pred_fallthru
          _
        // Predicated region
        $region25: #{object_in_hand_forward.3} parent=11 // pred_check
          %p190 = pneg %p124
        $region26: #{object_in_hand_forward.3} parent=11 // pred_check_branch
          %192 = sbr.rel (%p190) target = $region28
        $region27: #{object_in_hand_forward.3} parent=11 // pred_region
          %s194 = ssub.s32 16, 16
          %195 = vsyncadd [#allocation5], %s194
          %s197 = sshll.u32 %s4, 4
          %s198 = int_to_ptr.vmem [resolvable:$true] %s197
          %200 = dma.vmem_to_smem %s198, 16, [#allocation4], [#allocation5]
        $region28: #{object_in_hand_forward.3} parent=11 // pred_fallthru
          _
      $region12: #{object_in_hand_forward.3} parent=5 // pred_fallthru
        _
      %p201 = scmp.lt.s32.totalorder %s14, 20
      // Predicated region
      $region29: #{object_in_hand_forward.3} parent=5 // pred_check
        %p202 = pneg %p201
      $region30: #{object_in_hand_forward.3} parent=5 // pred_check_branch
        %204 = sbr.rel (%p202) target = $region32
      $region31: #{object_in_hand_forward.3} parent=5 // pred_region
        // Predicated region
        $region33: #{object_in_hand_forward.3} parent=31 // pred_check
          %p205 = pneg %p34
        $region34: #{object_in_hand_forward.3} parent=31 // pred_check_branch
          %207 = sbr.rel (%p205) target = $region36
        $region35: #{object_in_hand_forward.3} parent=31 // pred_region
          %p208 = scmp.lt.s32.totalorder %s14, 19
          %s209 = scalar_select %p208, %s14, 19
          %s210 = smul.addr %s209, 2
          %s211 = smul.addr %s210, 8
          %s212 = scalar_lea.vmem %s0, %s211
        $region36: #{object_in_hand_forward.3} parent=31 // pred_fallthru
          _
      $region32: #{object_in_hand_forward.3} parent=5 // pred_fallthru
        _
      %p213 = scmp.le.s32.totalorder 1, %s14
      %p214 = scmp.lt.s32.totalorder %s14, 21
      %p215 = pnand %p213, %p214
      %p216 = pneg %p215
      // Predicated region
      $region37: #{object_in_hand_forward.3} parent=5 // pred_check
        _
      $region38: #{object_in_hand_forward.3} parent=5 // pred_check_branch
        %218 = sbr.rel (%p215) target = $region40
      $region39: #{object_in_hand_forward.3} parent=5 // pred_region
        %s219 = ssub.s32 %s14, 1
        // Predicated region
        $region41: #{object_in_hand_forward.3} parent=39 // pred_check
          %p220 = pneg %p124
        $region42: #{object_in_hand_forward.3} parent=39 // pred_check_branch
          %222 = sbr.rel (%p220) target = $region44
        $region43: #{object_in_hand_forward.3} parent=39 // pred_region
          %223 = dma.done [#allocation5], 16
        $region44: #{object_in_hand_forward.3} parent=39 // pred_fallthru
          _
        %224 = sfence
        %p225 = scmp.lt.s32.totalorder %s19, 19
        %s226 = scalar_select %p225, %s19, 19
        %s227 = smul.addr %s226, 2
        %s228 = smul.addr %s227, 8
        %s229 = scalar_lea.vmem %s0, %s228
        %p230 = pneg %p40
        %p231 = pneg %p37
        %p232 = pneg %p61
        %p233 = pneg %p58
        %p234 = pneg %p82
        %p235 = pneg %p79
        %p236 = pneg %p103
        %p237 = pneg %p100
        %p238 = pneg %p124
        %p239 = pneg %p121
        %p240 = pneg %p145
        %p241 = pneg %p142
        %p242 = pneg %p166
        %p243 = pneg %p163
        %p244 = scmp.lt.s32.totalorder %s19, 19
        %s245 = scalar_select %p244, %s19, 19
        %s246 = smul.addr %s245, 2
        %s247 = smul.addr %s246, 8
        %s248 = scalar_lea.vmem %s0, %s247
        %p249 = scmp.eq.s32.totalorder %s19, 0
        // Predicated region
        $region45: #{object_in_hand_forward.3} parent=39 // pred_check
          %p250 = pneg %p249
        $region46: #{object_in_hand_forward.3} parent=39 // pred_check_branch
          %252 = sbr.rel (%p250) target = $region48
        $region47: #{object_in_hand_forward.3} parent=39 // pred_region
          %vm253 = vcmask 130048
          %254 = vst.msk [vmem:[#allocation2] sm:$0xff] %vm253, -inf
          %vm255 = vcmask 125952
          %256 = vst.msk [vmem:[#allocation2 + $0x8] sm:$0xf] %vm255, -inf
          %257 = vst.msk [vmem:[#allocation3] sm:$0xff] %vm253, 0
          %258 = vst.msk [vmem:[#allocation3 + $0x8] sm:$0xf] %vm255, 0
        $region48: #{object_in_hand_forward.3} parent=39 // pred_fallthru
          _
        %v259 = vld [vmem:[%s1] sm:$0xff]
        %v260 = vld [vmem:[%s1 + $0x8] sm:$0xf]
        %v261 = vld [vmem:[%s248] sm:$0xff]
        %v262 = vld [vmem:[%s248 + $0x8] sm:$0xf]
        %vm263 = vcmask 97280
        %v265 = vsel %vm263, %v259, 0
        %v268 = vsel %vm263, %v260, 0
        %vm270 = vcmask 1043456
        %v272 = vsel %vm270, %v262, 0
        %274 = vmatprep.subr.mxu0 0.0
        %275 = vmatpush1.msra.mxu0 %v261
        %276 = vmatprep.subr.mxu0 0.0
        %277 = vmatpush1.msra.mxu0 %v272
        %278 = vmatprep.subr.mxu0 0.0
        %279 = vmatpush1.msra.mxu0 0.0
        %280 = vmatprep.subr.mxu0 0.0
        %281 = vmatpush1.msra.mxu0 0.0
        %282 = vmatprep.subr.mxu0 0.0
        %283 = vmatpush1.msra.mxu0 0.0
        %284 = vmatprep.subr.mxu0 0.0
        %285 = vmatpush1.msra.mxu0 0.0
        %286 = vmatprep.subr.mxu0 0.0
        %287 = vmatpush1.msra.mxu0 0.0
        %288 = vmatprep.subr.mxu0 0.0
        %289 = vmatpush1.msra.mxu0 0.0
        %290 = vmatprep.subr.mxu0 0.0
        %291 = vmatpush1.msra.mxu0 0.0
        %292 = vmatprep.subr.mxu0 0.0
        %293 = vmatpush1.msra.mxu0 0.0
        %294 = vmatprep.subr.mxu0 0.0
        %295 = vmatpush1.msra.mxu0 0.0
        %296 = vmatprep.subr.mxu0 0.0
        %297 = vmatpush1.msra.mxu0 0.0
        %298 = vmatprep.subr.mxu0 0.0
        %299 = vmatpush1.msra.mxu0 0.0
        %300 = vmatprep.subr.mxu0 0.0
        %301 = vmatpush1.msra.mxu0 0.0
        %302 = vmatprep.subr.mxu0 0.0
        %303 = vmatpush1.msra.mxu0 0.0
        %304 = vmatprep.subr.mxu0 0.0
        %305 = vmatpush1.msra.mxu0 0.0
        %306 = vmatprep.subr.mxu0 0.0
        %307 = vmatpush1.msra.mxu0 0.0
        %308 = vmatprep.subr.mxu0 0.0
        %309 = vmatpush1.msra.mxu0 0.0
        %310 = vmatprep.subr.mxu0 0.0
        %311 = vmatpush1.msra.mxu0 0.0
        %312 = vmatprep.subr.mxu0 0.0
        %313 = vmatpush1.msra.mxu0 0.0
        %314 = vmatprep.subr.mxu0 0.0
        %315 = vmatpush1.msra.mxu0 0.0
        %316 = vmatprep.subr.mxu0 0.0
        %317 = vmatpush1.msra.mxu0 0.0
        %318 = vmatprep.subr.mxu0 0.0
        %319 = vmatpush1.msra.mxu0 0.0
        %320 = vmatprep.subr.mxu0 0.0
        %321 = vmatpush1.msra.mxu0 0.0
        %322 = vmatprep.subr.mxu0 0.0
        %323 = vmatpush1.msra.mxu0 0.0
        %324 = vmatprep.subr.mxu0 0.0
        %325 = vmatpush1.msra.mxu0 0.0
        %326 = vmatprep.subr.mxu0 0.0
        %327 = vmatpush1.msra.mxu0 0.0
        %328 = vmatprep.subr.mxu0 0.0
        %329 = vmatpush1.msra.mxu0 0.0
        %330 = vmatprep.subr.mxu0 0.0
        %331 = vmatpush1.msra.mxu0 0.0
        %332 = vmatprep.subr.mxu0 0.0
        %333 = vmatpush1.msra.mxu0 0.0
        %334 = vmatprep.subr.mxu0 0.0
        %335 = vmatpush1.msra.mxu0 0.0
        %336 = vmatprep.subr.mxu0 0.0
        %337 = vmatpush1.msra.mxu0 0.0
        %338 = vmatprep.mubr.f32.mxu0 0.0
        %339 = vmatmul.mubr.f32.gmra.mrb[0].mxu0 %v265
        %v340 = vpop.f32.mrb[0].mxu0
        %v341 = vadd.f32 0.0, %v340
        %v342 = vpop.f32.mrb[0].mxu0
        %343 = vmatprep.mubr.f32.mxu0 0.0
        %344 = vmatmul.mubr.f32.gmra.mrb[0].mxu0 %v268
        %v345 = vpop.f32.mrb[0].mxu0
        %v346 = vadd.f32 0.0, %v345
        %v347 = vpop.f32.mrb[0].mxu0
        %348 = vdwg.mxu0
        %v349 = vld [vmem:[%s2] sm:$0xff]
        %v350 = vld [vmem:[%s2 + $0x8] sm:$0xf]
        %v352 = vsel %vm263, %v341, 0
        %v355 = vsel %vm263, %v346, 0
        %v358 = vsel %vm270, %v350, 0
        %360 = vmatprep.subr.mxu0 0.0
        %361 = vmatpush1.msra.mxu0 %v349
        %362 = vmatprep.subr.mxu0 0.0
        %363 = vmatpush1.msra.mxu0 %v358
        %364 = vmatprep.subr.mxu0 0.0
        %365 = vmatpush1.msra.mxu0 0.0
        %366 = vmatprep.subr.mxu0 0.0
        %367 = vmatpush1.msra.mxu0 0.0
        %368 = vmatprep.subr.mxu0 0.0
        %369 = vmatpush1.msra.mxu0 0.0
        %370 = vmatprep.subr.mxu0 0.0
        %371 = vmatpush1.msra.mxu0 0.0
        %372 = vmatprep.subr.mxu0 0.0
        %373 = vmatpush1.msra.mxu0 0.0
        %374 = vmatprep.subr.mxu0 0.0
        %375 = vmatpush1.msra.mxu0 0.0
        %376 = vmatprep.subr.mxu0 0.0
        %377 = vmatpush1.msra.mxu0 0.0
        %378 = vmatprep.subr.mxu0 0.0
        %379 = vmatpush1.msra.mxu0 0.0
        %380 = vmatprep.subr.mxu0 0.0
        %381 = vmatpush1.msra.mxu0 0.0
        %382 = vmatprep.subr.mxu0 0.0
        %383 = vmatpush1.msra.mxu0 0.0
        %384 = vmatprep.subr.mxu0 0.0
        %385 = vmatpush1.msra.mxu0 0.0
        %386 = vmatprep.subr.mxu0 0.0
        %387 = vmatpush1.msra.mxu0 0.0
        %388 = vmatprep.subr.mxu0 0.0
        %389 = vmatpush1.msra.mxu0 0.0
        %390 = vmatprep.subr.mxu0 0.0
        %391 = vmatpush1.msra.mxu0 0.0
        %392 = vmatprep.subr.mxu0 0.0
        %393 = vmatpush1.msra.mxu0 0.0
        %394 = vmatprep.subr.mxu0 0.0
        %395 = vmatpush1.msra.mxu0 0.0
        %396 = vmatprep.subr.mxu0 0.0
        %397 = vmatpush1.msra.mxu0 0.0
        %398 = vmatprep.subr.mxu0 0.0
        %399 = vmatpush1.msra.mxu0 0.0
        %400 = vmatprep.subr.mxu0 0.0
        %401 = vmatpush1.msra.mxu0 0.0
        %402 = vmatprep.subr.mxu0 0.0
        %403 = vmatpush1.msra.mxu0 0.0
        %404 = vmatprep.subr.mxu0 0.0
        %405 = vmatpush1.msra.mxu0 0.0
        %406 = vmatprep.subr.mxu0 0.0
        %407 = vmatpush1.msra.mxu0 0.0
        %408 = vmatprep.subr.mxu0 0.0
        %409 = vmatpush1.msra.mxu0 0.0
        %410 = vmatprep.subr.mxu0 0.0
        %411 = vmatpush1.msra.mxu0 0.0
        %412 = vmatprep.subr.mxu0 0.0
        %413 = vmatpush1.msra.mxu0 0.0
        %414 = vmatprep.subr.mxu0 0.0
        %415 = vmatpush1.msra.mxu0 0.0
        %416 = vmatprep.subr.mxu0 0.0
        %417 = vmatpush1.msra.mxu0 0.0
        %418 = vmatprep.subr.mxu0 0.0
        %419 = vmatpush1.msra.mxu0 0.0
        %420 = vmatprep.subr.mxu0 0.0
        %421 = vmatpush1.msra.mxu0 0.0
        %422 = vmatprep.subr.mxu0 0.0
        %423 = vmatpush1.msra.mxu0 0.0
        %424 = vmatprep.mubr.f32.mxu0 0.0
        %425 = vmatmul.mubr.f32.gmra.mrb[0].mxu0 %v352
        %v426 = vpop.f32.mrb[0].mxu0
        %v427 = vadd.f32 0.0, %v426
        %v428 = vpop.f32.mrb[0].mxu0
        %429 = vmatprep.mubr.f32.mxu0 0.0
        %430 = vmatmul.mubr.f32.gmra.mrb[0].mxu0 %v355
        %v431 = vpop.f32.mrb[0].mxu0
        %v432 = vadd.f32 0.0, %v431
        %v433 = vpop.f32.mrb[0].mxu0
        %434 = vdwg.mxu0
        %v435 = vld [vmem:[#allocation2] sm:$0xff]
        %v436 = vld [vmem:[#allocation2 + $0x8] sm:$0xf]
        %vm437 = vcmp.gt.f32.partialorder %v427, %v435
        %vm438 = vcmp.gt.f32.partialorder %v432, %v436
        %v439 = vld [vmem:[#allocation3] sm:$0xff]
        %v440 = vld [vmem:[#allocation3 + $0x8] sm:$0xf]
        %v441 = vstv %s19
        %v442 = vsel %vm437, %v441, %v439
        %v443 = vsel %vm438, %v441, %v440
        %vm444 = vcmask 130048
        %445 = vst.msk [vmem:[#allocation3] sm:$0xff] %vm444, %v442
        %vm446 = vcmask 125952
        %447 = vst.msk [vmem:[#allocation3 + $0x8] sm:$0xf] %vm446, %v443
        %v448 = vld [vmem:[#allocation2] sm:$0xff]
        %v449 = vld [vmem:[#allocation2 + $0x8] sm:$0xf]
        %v450 = vsel %vm437, %v427, %v448
        %v451 = vsel %vm438, %v432, %v449
        %452 = vst.msk [vmem:[#allocation2] sm:$0xff] %vm444, %v450
        %453 = vst.msk [vmem:[#allocation2 + $0x8] sm:$0xf] %vm446, %v451
        %p454 = scmp.eq.s32.totalorder %s19, 19
        // Predicated region
        $region49: #{object_in_hand_forward.3} parent=39 // pred_check
          %p455 = pneg %p454
        $region50: #{object_in_hand_forward.3} parent=39 // pred_check_branch
          %457 = sbr.rel (%p455) target = $region52
        $region51: #{object_in_hand_forward.3} parent=39 // pred_region
          %v458 = vld [vmem:[#allocation3] sm:$0xff]
          %v459 = vld [vmem:[#allocation3 + $0x8] sm:$0xf]
          %vm460 = vcmp.eq.s32.totalorder %v458, 14
          %vm461 = vcmp.eq.s32.totalorder %v459, 14
          %vm462 = vcmp.eq.s32.totalorder %v458, 15
          %vm463 = vcmp.eq.s32.totalorder %v459, 15
          %vm464 = vmor %vm460, %vm462
          %vm465 = vmor %vm461, %vm463
          %v466 = vsel %vm464, 1, 0
          %v467 = vsel %vm465, 1, 0
          %v468 = vcvt.s32.f32 %v466
          %v469 = vcvt.s32.f32 %v467
          %s470 = sld [smem:[#allocation4]]
          %v471 = vld [vmem:[%s3] sm:$0xff]
          %v472 = vld [vmem:[%s3 + $0x8] sm:$0xf]
          %v473 = vstv %s470
          %v474 = vmul.f32 %v473, %v471
          %v475 = vmul.f32 %v473, %v472
          %s476 = sld [smem:[#allocation4 + $0x1]]
          %s477 = scalar_lea.vmem %s3, 16
          %v478 = vld [vmem:[%s477] sm:$0xff]
          %v479 = vld [vmem:[%s477 + $0x8] sm:$0xf]
          %v480 = vstv %s476
          %v481 = vmul.f32 %v480, %v478
          %v482 = vmul.f32 %v480, %v479
          %v483 = vadd.f32 %v474, %v481
          %v484 = vadd.f32 %v475, %v482
          %s485 = sld [smem:[#allocation4 + $0x2]]
          %s486 = scalar_lea.vmem %s3, 32
          %v487 = vld [vmem:[%s486] sm:$0xff]
          %v488 = vld [vmem:[%s486 + $0x8] sm:$0xf]
          %v489 = vstv %s485
          %v490 = vmul.f32 %v489, %v487
          %v491 = vmul.f32 %v489, %v488
          %v492 = vadd.f32 %v483, %v490
          %v493 = vadd.f32 %v484, %v491
          %s494 = sld [smem:[#allocation4 + $0x3]]
          %v495 = vstv %s494
          %v496 = vmul.f32 %v495, %v468
          %v497 = vmul.f32 %v495, %v469
          %v498 = vadd.f32 %v492, %v496
          %v499 = vadd.f32 %v493, %v497
          %s500 = sld [smem:[#allocation4 + $0x4]]
          %v501 = vstv %s500
          %v502 = vadd.f32 %v498, %v501
          %v503 = vadd.f32 %v499, %v501
          %504 = vst.msk [vmem:[%s5] sm:$0xff] %vm444, %v466
          %505 = vst.msk [vmem:[%s5 + $0x8] sm:$0xf] %vm446, %v467
          %vm506 = vcmp.gt.f32.partialorder %v502, 0.0
          %vm507 = vcmp.gt.f32.partialorder %v503, 0.0
          %v508 = vsel %vm506, 1, 0
          %v509 = vsel %vm507, 1, 0
          %510 = vst.msk [vmem:[%s6] sm:$0xff] %vm444, %v508
          %511 = vst.msk [vmem:[%s6 + $0x8] sm:$0xf] %vm446, %v509
        $region52: #{object_in_hand_forward.3} parent=39 // pred_fallthru
          _
        // Predicated region
        $region53: #{object_in_hand_forward.3} parent=39 // pred_check
          %p512 = pneg %p142
        $region54: #{object_in_hand_forward.3} parent=39 // pred_check_branch
          %514 = sbr.rel (%p512) target = $region56
        $region55: #{object_in_hand_forward.3} parent=39 // pred_region
          _
        $region56: #{object_in_hand_forward.3} parent=39 // pred_fallthru
          _
        // Predicated region
        $region57: #{object_in_hand_forward.3} parent=39 // pred_check
          %p515 = pneg %p163
        $region58: #{object_in_hand_forward.3} parent=39 // pred_check_branch
          %517 = sbr.rel (%p515) target = $region60
        $region59: #{object_in_hand_forward.3} parent=39 // pred_region
          _
        $region60: #{object_in_hand_forward.3} parent=39 // pred_fallthru
          _
        // Predicated region
        $region61: #{object_in_hand_forward.3} parent=39 // pred_check
          %p518 = pneg %p142
        $region62: #{object_in_hand_forward.3} parent=39 // pred_check_branch
          %520 = sbr.rel (%p518) target = $region64
        $region63: #{object_in_hand_forward.3} parent=39 // pred_region
          _
        $region64: #{object_in_hand_forward.3} parent=39 // pred_fallthru
          _
        // Predicated region
        $region65: #{object_in_hand_forward.3} parent=39 // pred_check
          %p521 = pneg %p163
        $region66: #{object_in_hand_forward.3} parent=39 // pred_check_branch
          %523 = sbr.rel (%p521) target = $region68
        $region67: #{object_in_hand_forward.3} parent=39 // pred_region
          _
        $region68: #{object_in_hand_forward.3} parent=39 // pred_fallthru
          _
      $region40: #{object_in_hand_forward.3} parent=5 // pred_fallthru
        _
      %p524 = scmp.le.s32.totalorder 2, %s14
      // Predicated region
      $region69: #{object_in_hand_forward.3} parent=5 // pred_check
        %p525 = pneg %p524
      $region70: #{object_in_hand_forward.3} parent=5 // pred_check_branch
        %527 = sbr.rel (%p525) target = $region72
      $region71: #{object_in_hand_forward.3} parent=5 // pred_region
        %s528 = ssub.s32 %s14, 2
      $region72: #{object_in_hand_forward.3} parent=5 // pred_fallthru
        _
    $region6: #{object_in_hand_forward.3} parent=1 // loop_footer
      %s18 = sadd.s32 1, %s14
    $region7: #{object_in_hand_forward.3} parent=1 // loop_footer_branch
      %13 = sbr.rel target = $region3
    $region8: #{object_in_hand_forward.3} parent=1 // loop_exit
      _
    %529 = vsyncpa [#allocation5], 1
    %s530 = scalar_lea.sflag [#allocation5], 1
    %531 = vsyncpa %s530, 1

// kernel: object_in_hand_forward.2
$region0: #{object_in_hand_forward.2}
  #allocation0 [shape = 'u32[]', space=smem, size = 0x4, offset = 0x4, fixed_abs, tag = 'smem constant byte address 0x4 - core index']
  #allocation1 [shape = 'u32[144,128]{1,0:T(1,128)}', space=vmem, size = 0x12000, scoped, tag = 'internal scratch']
  %s0 = inlined_call_operand.vmem [shape: f32[3,12,16], index: 0, kind: input, shape index: {}]
  %s1 = inlined_call_operand.vmem [shape: f32[12,12], index: 1, kind: input, shape index: {}]
  %s2 = inlined_call_operand.vmem [shape: f32[16,12], index: 2, kind: input, shape index: {}]
  %s3 = inlined_call_operand.vmem [shape: f32[60], index: 3, kind: input, shape index: {}]
  %s4 = inlined_call_operand.vmem [shape: f32[20], index: 4, kind: input, shape index: {}]
  %s5 = inlined_call_operand.vmem [shape: f32[20,12,12], index: 5, kind: output, shape index: {}]
  %s6 = sld [smem:[#allocation0]]
  $region38: #{object_in_hand_forward.2} parent=0
    _
  %s8 = ssub.s32 1, %s6
  %s9 = scalar_select 0, %s8, %s6
  $region1: #{object_in_hand_forward.2} parent=0
    #allocation2 [shape = 'u8[512]{0}', space=smem, size = 0x200, scoped, tag = 'input window, operand 3, single buffered']
    #allocation3 [shape = 's32[1]{0}', space=sflag, size = 0x4, scoped, tag = 'scoped memory for object_in_hand_forward.2']
    #allocation4 [shape = 'u8[512]{0}', space=smem, size = 0x200, scoped, tag = 'input window, operand 4, single buffered']
    #allocation5 [shape = 's32[1]{0}', space=sflag, size = 0x4, scoped, tag = 'scoped memory for object_in_hand_forward.2']
    %10 = vsyncpa [#allocation3], 0
    %11 = vsyncpa [#allocation5], 0
    // Predicated region
    $region2: #{object_in_hand_forward.2} parent=1 // pred_check
      _
    $region3: #{object_in_hand_forward.2} parent=1 // pred_check_branch
      %13 = sbr.rel (0) target = $region5
    $region4: #{object_in_hand_forward.2} parent=1 // pred_region
      _
    $region5: #{object_in_hand_forward.2} parent=1 // pred_fallthru
      _
    // Predicated region
    $region6: #{object_in_hand_forward.2} parent=1 // pred_check
      _
    $region7: #{object_in_hand_forward.2} parent=1 // pred_check_branch
      %15 = sbr.rel (0) target = $region9
    $region8: #{object_in_hand_forward.2} parent=1 // pred_region
      _
    $region9: #{object_in_hand_forward.2} parent=1 // pred_fallthru
      _
    // Predicated region
    $region10: #{object_in_hand_forward.2} parent=1 // pred_check
      _
    $region11: #{object_in_hand_forward.2} parent=1 // pred_check_branch
      %17 = sbr.rel (0) target = $region13
    $region12: #{object_in_hand_forward.2} parent=1 // pred_region
      _
    $region13: #{object_in_hand_forward.2} parent=1 // pred_fallthru
      _
    // Predicated region
    $region14: #{object_in_hand_forward.2} parent=1 // pred_check
      _
    $region15: #{object_in_hand_forward.2} parent=1 // pred_check_branch
      %19 = sbr.rel (0) target = $region17
    $region16: #{object_in_hand_forward.2} parent=1 // pred_region
      %s21 = ssub.s32 16, 16
      %22 = vsyncadd [#allocation3], %s21
      %s24 = sshll.u32 %s3, 4
      %s25 = int_to_ptr.vmem [resolvable:$true] %s24
      %27 = dma.vmem_to_smem %s25, 16, [#allocation2], [#allocation3]
    $region17: #{object_in_hand_forward.2} parent=1 // pred_fallthru
      _
    // Predicated region
    $region18: #{object_in_hand_forward.2} parent=1 // pred_check
      _
    $region19: #{object_in_hand_forward.2} parent=1 // pred_check_branch
      %29 = sbr.rel (0) target = $region21
    $region20: #{object_in_hand_forward.2} parent=1 // pred_region
      %s31 = ssub.s32 16, 16
      %32 = vsyncadd [#allocation5], %s31
      %s34 = sshll.u32 %s4, 4
      %s35 = int_to_ptr.vmem [resolvable:$true] %s34
      %37 = dma.vmem_to_smem %s35, 16, [#allocation4], [#allocation5]
    $region21: #{object_in_hand_forward.2} parent=1 // pred_fallthru
      _
    // Predicated region
    $region22: #{object_in_hand_forward.2} parent=1 // pred_check
      _
    $region23: #{object_in_hand_forward.2} parent=1 // pred_check_branch
      %39 = sbr.rel (0) target = $region25
    $region24: #{object_in_hand_forward.2} parent=1 // pred_region
      %40 = dma.done [#allocation3], 16
    $region25: #{object_in_hand_forward.2} parent=1 // pred_fallthru
      _
    // Predicated region
    $region26: #{object_in_hand_forward.2} parent=1 // pred_check
      _
    $region27: #{object_in_hand_forward.2} parent=1 // pred_check_branch
      %42 = sbr.rel (0) target = $region29
    $region28: #{object_in_hand_forward.2} parent=1 // pred_region
      %43 = dma.done [#allocation5], 16
    $region29: #{object_in_hand_forward.2} parent=1 // pred_fallthru
      _
    %44 = sfence
    %v45 = vld [vmem:[%s1] sm:$0xff]
    %v46 = vld [vmem:[%s1 + $0x8] sm:$0xf]
    %v47 = vld [vmem:[%s0] sm:$0xff]
    %v48 = vld [vmem:[%s0 + $0x8] sm:$0xf]
    %vm49 = vcmask 97280
    %v51 = vsel %vm49, %v45, 0
    %v54 = vsel %vm49, %v46, 0
    %vm56 = vcmask 1043456
    %v58 = vsel %vm56, %v48, 0
    %60 = vmatprep.subr.mxu0 0.0
    %61 = vmatpush1.msra.mxu0 %v47
    %62 = vmatprep.subr.mxu0 0.0
    %63 = vmatpush1.msra.mxu0 %v58
    %64 = vmatprep.subr.mxu0 0.0
    %65 = vmatpush1.msra.mxu0 0.0
    %66 = vmatprep.subr.mxu0 0.0
    %67 = vmatpush1.msra.mxu0 0.0
    %68 = vmatprep.subr.mxu0 0.0
    %69 = vmatpush1.msra.mxu0 0.0
    %70 = vmatprep.subr.mxu0 0.0
    %71 = vmatpush1.msra.mxu0 0.0
    %72 = vmatprep.subr.mxu0 0.0
    %73 = vmatpush1.msra.mxu0 0.0
    %74 = vmatprep.subr.mxu0 0.0
    %75 = vmatpush1.msra.mxu0 0.0
    %76 = vmatprep.subr.mxu0 0.0
    %77 = vmatpush1.msra.mxu0 0.0
    %78 = vmatprep.subr.mxu0 0.0
    %79 = vmatpush1.msra.mxu0 0.0
    %80 = vmatprep.subr.mxu0 0.0
    %81 = vmatpush1.msra.mxu0 0.0
    %82 = vmatprep.subr.mxu0 0.0
    %83 = vmatpush1.msra.mxu0 0.0
    %84 = vmatprep.subr.mxu0 0.0
    %85 = vmatpush1.msra.mxu0 0.0
    %86 = vmatprep.subr.mxu0 0.0
    %87 = vmatpush1.msra.mxu0 0.0
    %88 = vmatprep.subr.mxu0 0.0
    %89 = vmatpush1.msra.mxu0 0.0
    %90 = vmatprep.subr.mxu0 0.0
    %91 = vmatpush1.msra.mxu0 0.0
    %92 = vmatprep.subr.mxu0 0.0
    %93 = vmatpush1.msra.mxu0 0.0
    %94 = vmatprep.subr.mxu0 0.0
    %95 = vmatpush1.msra.mxu0 0.0
    %96 = vmatprep.subr.mxu0 0.0
    %97 = vmatpush1.msra.mxu0 0.0
    %98 = vmatprep.subr.mxu0 0.0
    %99 = vmatpush1.msra.mxu0 0.0
    %100 = vmatprep.subr.mxu0 0.0
    %101 = vmatpush1.msra.mxu0 0.0
    %102 = vmatprep.subr.mxu0 0.0
    %103 = vmatpush1.msra.mxu0 0.0
    %104 = vmatprep.subr.mxu0 0.0
    %105 = vmatpush1.msra.mxu0 0.0
    %106 = vmatprep.subr.mxu0 0.0
    %107 = vmatpush1.msra.mxu0 0.0
    %108 = vmatprep.subr.mxu0 0.0
    %109 = vmatpush1.msra.mxu0 0.0
    %110 = vmatprep.subr.mxu0 0.0
    %111 = vmatpush1.msra.mxu0 0.0
    %112 = vmatprep.subr.mxu0 0.0
    %113 = vmatpush1.msra.mxu0 0.0
    %114 = vmatprep.subr.mxu0 0.0
    %115 = vmatpush1.msra.mxu0 0.0
    %116 = vmatprep.subr.mxu0 0.0
    %117 = vmatpush1.msra.mxu0 0.0
    %118 = vmatprep.subr.mxu0 0.0
    %119 = vmatpush1.msra.mxu0 0.0
    %120 = vmatprep.subr.mxu0 0.0
    %121 = vmatpush1.msra.mxu0 0.0
    %122 = vmatprep.subr.mxu0 0.0
    %123 = vmatpush1.msra.mxu0 0.0
    %124 = vmatprep.mubr.f32.mxu0 0.0
    %125 = vmatmul.mubr.f32.gmra.mrb[0].mxu0 %v51
    %v126 = vpop.f32.mrb[0].mxu0
    %v127 = vadd.f32 0.0, %v126
    %v128 = vpop.f32.mrb[0].mxu0
    %129 = vmatprep.mubr.f32.mxu0 0.0
    %130 = vmatmul.mubr.f32.gmra.mrb[0].mxu0 %v54
    %v131 = vpop.f32.mrb[0].mxu0
    %v132 = vadd.f32 0.0, %v131
    %v133 = vpop.f32.mrb[0].mxu0
    %134 = vdwg.mxu0
    %v135 = vld [vmem:[%s2] sm:$0xff]
    %v136 = vld [vmem:[%s2 + $0x8] sm:$0xff]
    %vm137 = vcmask 130048
    %v139 = vsel %vm137, %v127, 0
    %v142 = vsel %vm137, %v132, 0
    %144 = vmatprep.subr.mxu0 0.0
    %145 = vmatpush1.msra.mxu0 %v135
    %146 = vmatprep.subr.mxu0 0.0
    %147 = vmatpush1.msra.mxu0 %v136
    %148 = vmatprep.subr.mxu0 0.0
    %149 = vmatpush1.msra.mxu0 0.0
    %150 = vmatprep.subr.mxu0 0.0
    %151 = vmatpush1.msra.mxu0 0.0
    %152 = vmatprep.subr.mxu0 0.0
    %153 = vmatpush1.msra.mxu0 0.0
    %154 = vmatprep.subr.mxu0 0.0
    %155 = vmatpush1.msra.mxu0 0.0
    %156 = vmatprep.subr.mxu0 0.0
    %157 = vmatpush1.msra.mxu0 0.0
    %158 = vmatprep.subr.mxu0 0.0
    %159 = vmatpush1.msra.mxu0 0.0
    %160 = vmatprep.subr.mxu0 0.0
    %161 = vmatpush1.msra.mxu0 0.0
    %162 = vmatprep.subr.mxu0 0.0
    %163 = vmatpush1.msra.mxu0 0.0
    %164 = vmatprep.subr.mxu0 0.0
    %165 = vmatpush1.msra.mxu0 0.0
    %166 = vmatprep.subr.mxu0 0.0
    %167 = vmatpush1.msra.mxu0 0.0
    %168 = vmatprep.subr.mxu0 0.0
    %169 = vmatpush1.msra.mxu0 0.0
    %170 = vmatprep.subr.mxu0 0.0
    %171 = vmatpush1.msra.mxu0 0.0
    %172 = vmatprep.subr.mxu0 0.0
    %173 = vmatpush1.msra.mxu0 0.0
    %174 = vmatprep.subr.mxu0 0.0
    %175 = vmatpush1.msra.mxu0 0.0
    %176 = vmatprep.subr.mxu0 0.0
    %177 = vmatpush1.msra.mxu0 0.0
    %178 = vmatprep.subr.mxu0 0.0
    %179 = vmatpush1.msra.mxu0 0.0
    %180 = vmatprep.subr.mxu0 0.0
    %181 = vmatpush1.msra.mxu0 0.0
    %182 = vmatprep.subr.mxu0 0.0
    %183 = vmatpush1.msra.mxu0 0.0
    %184 = vmatprep.subr.mxu0 0.0
    %185 = vmatpush1.msra.mxu0 0.0
    %186 = vmatprep.subr.mxu0 0.0
    %187 = vmatpush1.msra.mxu0 0.0
    %188 = vmatprep.subr.mxu0 0.0
    %189 = vmatpush1.msra.mxu0 0.0
    %190 = vmatprep.subr.mxu0 0.0
    %191 = vmatpush1.msra.mxu0 0.0
    %192 = vmatprep.subr.mxu0 0.0
    %193 = vmatpush1.msra.mxu0 0.0
    %194 = vmatprep.subr.mxu0 0.0
    %195 = vmatpush1.msra.mxu0 0.0
    %196 = vmatprep.subr.mxu0 0.0
    %197 = vmatpush1.msra.mxu0 0.0
    %198 = vmatprep.subr.mxu0 0.0
    %199 = vmatpush1.msra.mxu0 0.0
    %200 = vmatprep.subr.mxu0 0.0
    %201 = vmatpush1.msra.mxu0 0.0
    %202 = vmatprep.subr.mxu0 0.0
    %203 = vmatpush1.msra.mxu0 0.0
    %204 = vmatprep.subr.mxu0 0.0
    %205 = vmatpush1.msra.mxu0 0.0
    %206 = vmatprep.subr.mxu0 0.0
    %207 = vmatpush1.msra.mxu0 0.0
    %208 = vmatprep.mubr.f32.mxu0 0.0
    %209 = vmatmul.mubr.f32.gmra.mrb[0].mxu0 %v139
    %v210 = vpop.f32.mrb[0].mxu0
    %v211 = vadd.f32 0.0, %v210
    %v212 = vpop.f32.mrb[0].mxu0
    %213 = vmatprep.mubr.f32.mxu0 0.0
    %214 = vmatmul.mubr.f32.gmra.mrb[0].mxu0 %v142
    %v215 = vpop.f32.mrb[0].mxu0
    %v216 = vadd.f32 0.0, %v215
    %v217 = vpop.f32.mrb[0].mxu0
    %218 = vdwg.mxu0
    %s219 = scalar_lea.vmem %s0, 16
    %v220 = vld [vmem:[%s219] sm:$0xff]
    %v221 = vld [vmem:[%s219 + $0x8] sm:$0xf]
    %v223 = vsel %vm56, %v221, 0
    %225 = vmatprep.subr.mxu0 0.0
    %226 = vmatpush1.msra.mxu0 %v220
    %227 = vmatprep.subr.mxu0 0.0
    %228 = vmatpush1.msra.mxu0 %v223
    %229 = vmatprep.subr.mxu0 0.0
    %230 = vmatpush1.msra.mxu0 0.0
    %231 = vmatprep.subr.mxu0 0.0
    %232 = vmatpush1.msra.mxu0 0.0
    %233 = vmatprep.subr.mxu0 0.0
    %234 = vmatpush1.msra.mxu0 0.0
    %235 = vmatprep.subr.mxu0 0.0
    %236 = vmatpush1.msra.mxu0 0.0
    %237 = vmatprep.subr.mxu0 0.0
    %238 = vmatpush1.msra.mxu0 0.0
    %239 = vmatprep.subr.mxu0 0.0
    %240 = vmatpush1.msra.mxu0 0.0
    %241 = vmatprep.subr.mxu0 0.0
    %242 = vmatpush1.msra.mxu0 0.0
    %243 = vmatprep.subr.mxu0 0.0
    %244 = vmatpush1.msra.mxu0 0.0
    %245 = vmatprep.subr.mxu0 0.0
    %246 = vmatpush1.msra.mxu0 0.0
    %247 = vmatprep.subr.mxu0 0.0
    %248 = vmatpush1.msra.mxu0 0.0
    %249 = vmatprep.subr.mxu0 0.0
    %250 = vmatpush1.msra.mxu0 0.0
    %251 = vmatprep.subr.mxu0 0.0
    %252 = vmatpush1.msra.mxu0 0.0
    %253 = vmatprep.subr.mxu0 0.0
    %254 = vmatpush1.msra.mxu0 0.0
    %255 = vmatprep.subr.mxu0 0.0
    %256 = vmatpush1.msra.mxu0 0.0
    %257 = vmatprep.subr.mxu0 0.0
    %258 = vmatpush1.msra.mxu0 0.0
    %259 = vmatprep.subr.mxu0 0.0
    %260 = vmatpush1.msra.mxu0 0.0
    %261 = vmatprep.subr.mxu0 0.0
    %262 = vmatpush1.msra.mxu0 0.0
    %263 = vmatprep.subr.mxu0 0.0
    %264 = vmatpush1.msra.mxu0 0.0
    %265 = vmatprep.subr.mxu0 0.0
    %266 = vmatpush1.msra.mxu0 0.0
    %267 = vmatprep.subr.mxu0 0.0
    %268 = vmatpush1.msra.mxu0 0.0
    %269 = vmatprep.subr.mxu0 0.0
    %270 = vmatpush1.msra.mxu0 0.0
    %271 = vmatprep.subr.mxu0 0.0
    %272 = vmatpush1.msra.mxu0 0.0
    %273 = vmatprep.subr.mxu0 0.0
    %274 = vmatpush1.msra.mxu0 0.0
    %275 = vmatprep.subr.mxu0 0.0
    %276 = vmatpush1.msra.mxu0 0.0
    %277 = vmatprep.subr.mxu0 0.0
    %278 = vmatpush1.msra.mxu0 0.0
    %279 = vmatprep.subr.mxu0 0.0
    %280 = vmatpush1.msra.mxu0 0.0
    %281 = vmatprep.subr.mxu0 0.0
    %282 = vmatpush1.msra.mxu0 0.0
    %283 = vmatprep.subr.mxu0 0.0
    %284 = vmatpush1.msra.mxu0 0.0
    %285 = vmatprep.subr.mxu0 0.0
    %286 = vmatpush1.msra.mxu0 0.0
    %287 = vmatprep.subr.mxu0 0.0
    %288 = vmatpush1.msra.mxu0 0.0
    %289 = vmatprep.mubr.f32.mxu0 0.0
    %290 = vmatmul.mubr.f32.gmra.mrb[0].mxu0 %v51
    %v291 = vpop.f32.mrb[0].mxu0
    %v292 = vadd.f32 0.0, %v291
    %v293 = vpop.f32.mrb[0].mxu0
    %294 = vmatprep.mubr.f32.mxu0 0.0
    %295 = vmatmul.mubr.f32.gmra.mrb[0].mxu0 %v54
    %v296 = vpop.f32.mrb[0].mxu0
    %v297 = vadd.f32 0.0, %v296
    %v298 = vpop.f32.mrb[0].mxu0
    %299 = vdwg.mxu0
    %v301 = vsel %vm137, %v292, 0
    %v304 = vsel %vm137, %v297, 0
    %306 = vmatprep.subr.mxu0 0.0
    %307 = vmatpush1.msra.mxu0 %v135
    %308 = vmatprep.subr.mxu0 0.0
    %309 = vmatpush1.msra.mxu0 %v136
    %310 = vmatprep.subr.mxu0 0.0
    %311 = vmatpush1.msra.mxu0 0.0
    %312 = vmatprep.subr.mxu0 0.0
    %313 = vmatpush1.msra.mxu0 0.0
    %314 = vmatprep.subr.mxu0 0.0
    %315 = vmatpush1.msra.mxu0 0.0
    %316 = vmatprep.subr.mxu0 0.0
    %317 = vmatpush1.msra.mxu0 0.0
    %318 = vmatprep.subr.mxu0 0.0
    %319 = vmatpush1.msra.mxu0 0.0
    %320 = vmatprep.subr.mxu0 0.0
    %321 = vmatpush1.msra.mxu0 0.0
    %322 = vmatprep.subr.mxu0 0.0
    %323 = vmatpush1.msra.mxu0 0.0
    %324 = vmatprep.subr.mxu0 0.0
    %325 = vmatpush1.msra.mxu0 0.0
    %326 = vmatprep.subr.mxu0 0.0
    %327 = vmatpush1.msra.mxu0 0.0
    %328 = vmatprep.subr.mxu0 0.0
    %329 = vmatpush1.msra.mxu0 0.0
    %330 = vmatprep.subr.mxu0 0.0
    %331 = vmatpush1.msra.mxu0 0.0
    %332 = vmatprep.subr.mxu0 0.0
    %333 = vmatpush1.msra.mxu0 0.0
    %334 = vmatprep.subr.mxu0 0.0
    %335 = vmatpush1.msra.mxu0 0.0
    %336 = vmatprep.subr.mxu0 0.0
    %337 = vmatpush1.msra.mxu0 0.0
    %338 = vmatprep.subr.mxu0 0.0
    %339 = vmatpush1.msra.mxu0 0.0
    %340 = vmatprep.subr.mxu0 0.0
    %341 = vmatpush1.msra.mxu0 0.0
    %342 = vmatprep.subr.mxu0 0.0
    %343 = vmatpush1.msra.mxu0 0.0
    %344 = vmatprep.subr.mxu0 0.0
    %345 = vmatpush1.msra.mxu0 0.0
    %346 = vmatprep.subr.mxu0 0.0
    %347 = vmatpush1.msra.mxu0 0.0
    %348 = vmatprep.subr.mxu0 0.0
    %349 = vmatpush1.msra.mxu0 0.0
    %350 = vmatprep.subr.mxu0 0.0
    %351 = vmatpush1.msra.mxu0 0.0
    %352 = vmatprep.subr.mxu0 0.0
    %353 = vmatpush1.msra.mxu0 0.0
    %354 = vmatprep.subr.mxu0 0.0
    %355 = vmatpush1.msra.mxu0 0.0
    %356 = vmatprep.subr.mxu0 0.0
    %357 = vmatpush1.msra.mxu0 0.0
    %358 = vmatprep.subr.mxu0 0.0
    %359 = vmatpush1.msra.mxu0 0.0
    %360 = vmatprep.subr.mxu0 0.0
    %361 = vmatpush1.msra.mxu0 0.0
    %362 = vmatprep.subr.mxu0 0.0
    %363 = vmatpush1.msra.mxu0 0.0
    %364 = vmatprep.subr.mxu0 0.0
    %365 = vmatpush1.msra.mxu0 0.0
    %366 = vmatprep.subr.mxu0 0.0
    %367 = vmatpush1.msra.mxu0 0.0
    %368 = vmatprep.subr.mxu0 0.0
    %369 = vmatpush1.msra.mxu0 0.0
    %370 = vmatprep.mubr.f32.mxu0 0.0
    %371 = vmatmul.mubr.f32.gmra.mrb[0].mxu0 %v301
    %v372 = vpop.f32.mrb[0].mxu0
    %v373 = vadd.f32 0.0, %v372
    %v374 = vpop.f32.mrb[0].mxu0
    %375 = vmatprep.mubr.f32.mxu0 0.0
    %376 = vmatmul.mubr.f32.gmra.mrb[0].mxu0 %v304
    %v377 = vpop.f32.mrb[0].mxu0
    %v378 = vadd.f32 0.0, %v377
    %v379 = vpop.f32.mrb[0].mxu0
    %380 = vdwg.mxu0
    %s381 = scalar_lea.vmem %s0, 32
    %v382 = vld [vmem:[%s381] sm:$0xff]
    %v383 = vld [vmem:[%s381 + $0x8] sm:$0xf]
    %v385 = vsel %vm56, %v383, 0
    %387 = vmatprep.subr.mxu0 0.0
    %388 = vmatpush1.msra.mxu0 %v382
    %389 = vmatprep.subr.mxu0 0.0
    %390 = vmatpush1.msra.mxu0 %v385
    %391 = vmatprep.subr.mxu0 0.0
    %392 = vmatpush1.msra.mxu0 0.0
    %393 = vmatprep.subr.mxu0 0.0
    %394 = vmatpush1.msra.mxu0 0.0
    %395 = vmatprep.subr.mxu0 0.0
    %396 = vmatpush1.msra.mxu0 0.0
    %397 = vmatprep.subr.mxu0 0.0
    %398 = vmatpush1.msra.mxu0 0.0
    %399 = vmatprep.subr.mxu0 0.0
    %400 = vmatpush1.msra.mxu0 0.0
    %401 = vmatprep.subr.mxu0 0.0
    %402 = vmatpush1.msra.mxu0 0.0
    %403 = vmatprep.subr.mxu0 0.0
    %404 = vmatpush1.msra.mxu0 0.0
    %405 = vmatprep.subr.mxu0 0.0
    %406 = vmatpush1.msra.mxu0 0.0
    %407 = vmatprep.subr.mxu0 0.0
    %408 = vmatpush1.msra.mxu0 0.0
    %409 = vmatprep.subr.mxu0 0.0
    %410 = vmatpush1.msra.mxu0 0.0
    %411 = vmatprep.subr.mxu0 0.0
    %412 = vmatpush1.msra.mxu0 0.0
    %413 = vmatprep.subr.mxu0 0.0
    %414 = vmatpush1.msra.mxu0 0.0
    %415 = vmatprep.subr.mxu0 0.0
    %416 = vmatpush1.msra.mxu0 0.0
    %417 = vmatprep.subr.mxu0 0.0
    %418 = vmatpush1.msra.mxu0 0.0
    %419 = vmatprep.subr.mxu0 0.0
    %420 = vmatpush1.msra.mxu0 0.0
    %421 = vmatprep.subr.mxu0 0.0
    %422 = vmatpush1.msra.mxu0 0.0
    %423 = vmatprep.subr.mxu0 0.0
    %424 = vmatpush1.msra.mxu0 0.0
    %425 = vmatprep.subr.mxu0 0.0
    %426 = vmatpush1.msra.mxu0 0.0
    %427 = vmatprep.subr.mxu0 0.0
    %428 = vmatpush1.msra.mxu0 0.0
    %429 = vmatprep.subr.mxu0 0.0
    %430 = vmatpush1.msra.mxu0 0.0
    %431 = vmatprep.subr.mxu0 0.0
    %432 = vmatpush1.msra.mxu0 0.0
    %433 = vmatprep.subr.mxu0 0.0
    %434 = vmatpush1.msra.mxu0 0.0
    %435 = vmatprep.subr.mxu0 0.0
    %436 = vmatpush1.msra.mxu0 0.0
    %437 = vmatprep.subr.mxu0 0.0
    %438 = vmatpush1.msra.mxu0 0.0
    %439 = vmatprep.subr.mxu0 0.0
    %440 = vmatpush1.msra.mxu0 0.0
    %441 = vmatprep.subr.mxu0 0.0
    %442 = vmatpush1.msra.mxu0 0.0
    %443 = vmatprep.subr.mxu0 0.0
    %444 = vmatpush1.msra.mxu0 0.0
    %445 = vmatprep.subr.mxu0 0.0
    %446 = vmatpush1.msra.mxu0 0.0
    %447 = vmatprep.subr.mxu0 0.0
    %448 = vmatpush1.msra.mxu0 0.0
    %449 = vmatprep.subr.mxu0 0.0
    %450 = vmatpush1.msra.mxu0 0.0
    %451 = vmatprep.mubr.f32.mxu0 0.0
    %452 = vmatmul.mubr.f32.gmra.mrb[0].mxu0 %v51
    %v453 = vpop.f32.mrb[0].mxu0
    %v454 = vadd.f32 0.0, %v453
    %v455 = vpop.f32.mrb[0].mxu0
    %456 = vmatprep.mubr.f32.mxu0 0.0
    %457 = vmatmul.mubr.f32.gmra.mrb[0].mxu0 %v54
    %v458 = vpop.f32.mrb[0].mxu0
    %v459 = vadd.f32 0.0, %v458
    %v460 = vpop.f32.mrb[0].mxu0
    %461 = vdwg.mxu0
    %v463 = vsel %vm137, %v454, 0
    %v466 = vsel %vm137, %v459, 0
    %468 = vmatprep.subr.mxu0 0.0
    %469 = vmatpush1.msra.mxu0 %v135
    %470 = vmatprep.subr.mxu0 0.0
    %471 = vmatpush1.msra.mxu0 %v136
    %472 = vmatprep.subr.mxu0 0.0
    %473 = vmatpush1.msra.mxu0 0.0
    %474 = vmatprep.subr.mxu0 0.0
    %475 = vmatpush1.msra.mxu0 0.0
    %476 = vmatprep.subr.mxu0 0.0
    %477 = vmatpush1.msra.mxu0 0.0
    %478 = vmatprep.subr.mxu0 0.0
    %479 = vmatpush1.msra.mxu0 0.0
    %480 = vmatprep.subr.mxu0 0.0
    %481 = vmatpush1.msra.mxu0 0.0
    %482 = vmatprep.subr.mxu0 0.0
    %483 = vmatpush1.msra.mxu0 0.0
    %484 = vmatprep.subr.mxu0 0.0
    %485 = vmatpush1.msra.mxu0 0.0
    %486 = vmatprep.subr.mxu0 0.0
    %487 = vmatpush1.msra.mxu0 0.0
    %488 = vmatprep.subr.mxu0 0.0
    %489 = vmatpush1.msra.mxu0 0.0
    %490 = vmatprep.subr.mxu0 0.0
    %491 = vmatpush1.msra.mxu0 0.0
    %492 = vmatprep.subr.mxu0 0.0
    %493 = vmatpush1.msra.mxu0 0.0
    %494 = vmatprep.subr.mxu0 0.0
    %495 = vmatpush1.msra.mxu0 0.0
    %496 = vmatprep.subr.mxu0 0.0
    %497 = vmatpush1.msra.mxu0 0.0
    %498 = vmatprep.subr.mxu0 0.0
    %499 = vmatpush1.msra.mxu0 0.0
    %500 = vmatprep.subr.mxu0 0.0
    %501 = vmatpush1.msra.mxu0 0.0
    %502 = vmatprep.subr.mxu0 0.0
    %503 = vmatpush1.msra.mxu0 0.0
    %504 = vmatprep.subr.mxu0 0.0
    %505 = vmatpush1.msra.mxu0 0.0
    %506 = vmatprep.subr.mxu0 0.0
    %507 = vmatpush1.msra.mxu0 0.0
    %508 = vmatprep.subr.mxu0 0.0
    %509 = vmatpush1.msra.mxu0 0.0
    %510 = vmatprep.subr.mxu0 0.0
    %511 = vmatpush1.msra.mxu0 0.0
    %512 = vmatprep.subr.mxu0 0.0
    %513 = vmatpush1.msra.mxu0 0.0
    %514 = vmatprep.subr.mxu0 0.0
    %515 = vmatpush1.msra.mxu0 0.0
    %516 = vmatprep.subr.mxu0 0.0
    %517 = vmatpush1.msra.mxu0 0.0
    %518 = vmatprep.subr.mxu0 0.0
    %519 = vmatpush1.msra.mxu0 0.0
    %520 = vmatprep.subr.mxu0 0.0
    %521 = vmatpush1.msra.mxu0 0.0
    %522 = vmatprep.subr.mxu0 0.0
    %523 = vmatpush1.msra.mxu0 0.0
    %524 = vmatprep.subr.mxu0 0.0
    %525 = vmatpush1.msra.mxu0 0.0
    %526 = vmatprep.subr.mxu0 0.0
    %527 = vmatpush1.msra.mxu0 0.0
    %528 = vmatprep.subr.mxu0 0.0
    %529 = vmatpush1.msra.mxu0 0.0
    %530 = vmatprep.subr.mxu0 0.0
    %531 = vmatpush1.msra.mxu0 0.0
    %532 = vmatprep.mubr.f32.mxu0 0.0
    %533 = vmatmul.mubr.f32.gmra.mrb[0].mxu0 %v463
    %v534 = vpop.f32.mrb[0].mxu0
    %v535 = vadd.f32 0.0, %v534
    %v536 = vpop.f32.mrb[0].mxu0
    %537 = vmatprep.mubr.f32.mxu0 0.0
    %538 = vmatmul.mubr.f32.gmra.mrb[0].mxu0 %v466
    %v539 = vpop.f32.mrb[0].mxu0
    %v540 = vadd.f32 0.0, %v539
    %v541 = vpop.f32.mrb[0].mxu0
    %542 = vdwg.mxu0
    %s543 = sld [smem:[#allocation2]]
    %v544 = vstv %s543
    %v545 = vmul.f32 %v544, %v211
    %v546 = vmul.f32 %v544, %v216
    %s547 = sld [smem:[#allocation2 + $0x14]]
    %v548 = vstv %s547
    %v549 = vmul.f32 %v548, %v373
    %v550 = vmul.f32 %v548, %v378
    %v551 = vadd.f32 %v545, %v549
    %v552 = vadd.f32 %v546, %v550
    %s553 = sld [smem:[#allocation2 + $0x28]]
    %v554 = vstv %s553
    %v555 = vmul.f32 %v554, %v535
    %v556 = vmul.f32 %v554, %v540
    %v557 = vadd.f32 %v551, %v555
    %v558 = vadd.f32 %v552, %v556
    %s559 = sld [smem:[#allocation4]]
    %v560 = vstv %s559
    %v561 = vadd.f32 %v557, %v560
    %v562 = vadd.f32 %v558, %v560
    %563 = vst.msk [vmem:[%s5] sm:$0xff] %vm49, %v561
    %vm564 = vcmask 93184
    %565 = vst.msk [vmem:[%s5 + $0x8] sm:$0xf] %vm564, %v562
    %s566 = sld [smem:[#allocation2 + $0x1]]
    %v567 = vstv %s566
    %v568 = vmul.f32 %v567, %v211
    %v569 = vmul.f32 %v567, %v216
    %s570 = sld [smem:[#allocation2 + $0x15]]
    %v571 = vstv %s570
    %v572 = vmul.f32 %v571, %v373
    %v573 = vmul.f32 %v571, %v378
    %v574 = vadd.f32 %v568, %v572
    %v575 = vadd.f32 %v569, %v573
    %s576 = sld [smem:[#allocation2 + $0x29]]
    %v577 = vstv %s576
    %v578 = vmul.f32 %v577, %v535
    %v579 = vmul.f32 %v577, %v540
    %v580 = vadd.f32 %v574, %v578
    %v581 = vadd.f32 %v575, %v579
    %s582 = sld [smem:[#allocation4 + $0x1]]
    %v583 = vstv %s582
    %v584 = vadd.f32 %v580, %v583
    %v585 = vadd.f32 %v581, %v583
    %s586 = scalar_lea.vmem %s5, 16
    %587 = vst.msk [vmem:[%s586] sm:$0xff] %vm49, %v584
    %588 = vst.msk [vmem:[%s586 + $0x8] sm:$0xf] %vm564, %v585
    %s589 = sld [smem:[#allocation2 + $0x2]]
    %v590 = vstv %s589
    %v591 = vmul.f32 %v590, %v211
    %v592 = vmul.f32 %v590, %v216
    %s593 = sld [smem:[#allocation2 + $0x16]]
    %v594 = vstv %s593
    %v595 = vmul.f32 %v594, %v373
    %v596 = vmul.f32 %v594, %v378
    %v597 = vadd.f32 %v591, %v595
    %v598 = vadd.f32 %v592, %v596
    %s599 = sld [smem:[#allocation2 + $0x2a]]
    %v600 = vstv %s599
    %v601 = vmul.f32 %v600, %v535
    %v602 = vmul.f32 %v600, %v540
    %v603 = vadd.f32 %v597, %v601
    %v604 = vadd.f32 %v598, %v602
    %s605 = sld [smem:[#allocation4 + $0x2]]
    %v606 = vstv %s605
    %v607 = vadd.f32 %v603, %v606
    %v608 = vadd.f32 %v604, %v606
    %s609 = scalar_lea.vmem %s5, 32
    %610 = vst.msk [vmem:[%s609] sm:$0xff] %vm49, %v607
    %611 = vst.msk [vmem:[%s609 + $0x8] sm:$0xf] %vm564, %v608
    %s612 = sld [smem:[#allocation2 + $0x3]]
    %v613 = vstv %s612
    %v614 = vmul.f32 %v613, %v211
    %v615 = vmul.f32 %v613, %v216
    %s616 = sld [smem:[#allocation2 + $0x17]]
    %v617 = vstv %s616
    %v618 = vmul.f32 %v617, %v373
    %v619 = vmul.f32 %v617, %v378
    %v620 = vadd.f32 %v614, %v618
    %v621 = vadd.f32 %v615, %v619
    %s622 = sld [smem:[#allocation2 + $0x2b]]
    %v623 = vstv %s622
    %v624 = vmul.f32 %v623, %v535
    %v625 = vmul.f32 %v623, %v540
    %v626 = vadd.f32 %v620, %v624
    %v627 = vadd.f32 %v621, %v625
    %s628 = sld [smem:[#allocation4 + $0x3]]
    %v629 = vstv %s628
    %v630 = vadd.f32 %v626, %v629
    %v631 = vadd.f32 %v627, %v629
    %s632 = scalar_lea.vmem %s5, 48
    %633 = vst.msk [vmem:[%s632] sm:$0xff] %vm49, %v630
    %634 = vst.msk [vmem:[%s632 + $0x8] sm:$0xf] %vm564, %v631
    %s635 = sld [smem:[#allocation2 + $0x4]]
    %v636 = vstv %s635
    %v637 = vmul.f32 %v636, %v211
    %v638 = vmul.f32 %v636, %v216
    %s639 = sld [smem:[#allocation2 + $0x18]]
    %v640 = vstv %s639
    %v641 = vmul.f32 %v640, %v373
    %v642 = vmul.f32 %v640, %v378
    %v643 = vadd.f32 %v637, %v641
    %v644 = vadd.f32 %v638, %v642
    %s645 = sld [smem:[#allocation2 + $0x2c]]
    %v646 = vstv %s645
    %v647 = vmul.f32 %v646, %v535
    %v648 = vmul.f32 %v646, %v540
    %v649 = vadd.f32 %v643, %v647
    %v650 = vadd.f32 %v644, %v648
    %s651 = sld [smem:[#allocation4 + $0x4]]
    %v652 = vstv %s651
    %v653 = vadd.f32 %v649, %v652
    %v654 = vadd.f32 %v650, %v652
    %s655 = scalar_lea.vmem %s5, 64
    %656 = vst.msk [vmem:[%s655] sm:$0xff] %vm49, %v653
    %657 = vst.msk [vmem:[%s655 + $0x8] sm:$0xf] %vm564, %v654
    %s658 = sld [smem:[#allocation2 + $0x5]]
    %v659 = vstv %s658
    %v660 = vmul.f32 %v659, %v211
    %v661 = vmul.f32 %v659, %v216
    %s662 = sld [smem:[#allocation2 + $0x19]]
    %v663 = vstv %s662
    %v664 = vmul.f32 %v663, %v373
    %v665 = vmul.f32 %v663, %v378
    %v666 = vadd.f32 %v660, %v664
    %v667 = vadd.f32 %v661, %v665
    %s668 = sld [smem:[#allocation2 + $0x2d]]
    %v669 = vstv %s668
    %v670 = vmul.f32 %v669, %v535
    %v671 = vmul.f32 %v669, %v540
    %v672 = vadd.f32 %v666, %v670
    %v673 = vadd.f32 %v667, %v671
    %s674 = sld [smem:[#allocation4 + $0x5]]
    %v675 = vstv %s674
    %v676 = vadd.f32 %v672, %v675
    %v677 = vadd.f32 %v673, %v675
    %s678 = scalar_lea.vmem %s5, 80
    %679 = vst.msk [vmem:[%s678] sm:$0xff] %vm49, %v676
    %680 = vst.msk [vmem:[%s678 + $0x8] sm:$0xf] %vm564, %v677
    %s681 = sld [smem:[#allocation2 + $0x6]]
    %v682 = vstv %s681
    %v683 = vmul.f32 %v682, %v211
    %v684 = vmul.f32 %v682, %v216
    %s685 = sld [smem:[#allocation2 + $0x1a]]
    %v686 = vstv %s685
    %v687 = vmul.f32 %v686, %v373
    %v688 = vmul.f32 %v686, %v378
    %v689 = vadd.f32 %v683, %v687
    %v690 = vadd.f32 %v684, %v688
    %s691 = sld [smem:[#allocation2 + $0x2e]]
    %v692 = vstv %s691
    %v693 = vmul.f32 %v692, %v535
    %v694 = vmul.f32 %v692, %v540
    %v695 = vadd.f32 %v689, %v693
    %v696 = vadd.f32 %v690, %v694
    %s697 = sld [smem:[#allocation4 + $0x6]]
    %v698 = vstv %s697
    %v699 = vadd.f32 %v695, %v698
    %v700 = vadd.f32 %v696, %v698
    %s701 = scalar_lea.vmem %s5, 96
    %702 = vst.msk [vmem:[%s701] sm:$0xff] %vm49, %v699
    %703 = vst.msk [vmem:[%s701 + $0x8] sm:$0xf] %vm564, %v700
    %s704 = sld [smem:[#allocation2 + $0x7]]
    %v705 = vstv %s704
    %v706 = vmul.f32 %v705, %v211
    %v707 = vmul.f32 %v705, %v216
    %s708 = sld [smem:[#allocation2 + $0x1b]]
    %v709 = vstv %s708
    %v710 = vmul.f32 %v709, %v373
    %v711 = vmul.f32 %v709, %v378
    %v712 = vadd.f32 %v706, %v710
    %v713 = vadd.f32 %v707, %v711
    %s714 = sld [smem:[#allocation2 + $0x2f]]
    %v715 = vstv %s714
    %v716 = vmul.f32 %v715, %v535
    %v717 = vmul.f32 %v715, %v540
    %v718 = vadd.f32 %v712, %v716
    %v719 = vadd.f32 %v713, %v717
    %s720 = sld [smem:[#allocation4 + $0x7]]
    %v721 = vstv %s720
    %v722 = vadd.f32 %v718, %v721
    %v723 = vadd.f32 %v719, %v721
    %s724 = scalar_lea.vmem %s5, 112
    %725 = vst.msk [vmem:[%s724] sm:$0xff] %vm49, %v722
    %726 = vst.msk [vmem:[%s724 + $0x8] sm:$0xf] %vm564, %v723
    %s727 = sld [smem:[#allocation2 + $0x8]]
    %v728 = vstv %s727
    %v729 = vmul.f32 %v728, %v211
    %v730 = vmul.f32 %v728, %v216
    %s731 = sld [smem:[#allocation2 + $0x1c]]
    %v732 = vstv %s731
    %v733 = vmul.f32 %v732, %v373
    %v734 = vmul.f32 %v732, %v378
    %v735 = vadd.f32 %v729, %v733
    %v736 = vadd.f32 %v730, %v734
    %s737 = sld [smem:[#allocation2 + $0x30]]
    %v738 = vstv %s737
    %v739 = vmul.f32 %v738, %v535
    %v740 = vmul.f32 %v738, %v540
    %v741 = vadd.f32 %v735, %v739
    %v742 = vadd.f32 %v736, %v740
    %s743 = sld [smem:[#allocation4 + $0x8]]
    %v744 = vstv %s743
    %v745 = vadd.f32 %v741, %v744
    %v746 = vadd.f32 %v742, %v744
    %s747 = scalar_lea.vmem %s5, 128
    %748 = vst.msk [vmem:[%s747] sm:$0xff] %vm49, %v745
    %749 = vst.msk [vmem:[%s747 + $0x8] sm:$0xf] %vm564, %v746
    %s750 = sld [smem:[#allocation2 + $0x9]]
    %v751 = vstv %s750
    %v752 = vmul.f32 %v751, %v211
    %v753 = vmul.f32 %v751, %v216
    %s754 = sld [smem:[#allocation2 + $0x1d]]
    %v755 = vstv %s754
    %v756 = vmul.f32 %v755, %v373
    %v757 = vmul.f32 %v755, %v378
    %v758 = vadd.f32 %v752, %v756
    %v759 = vadd.f32 %v753, %v757
    %s760 = sld [smem:[#allocation2 + $0x31]]
    %v761 = vstv %s760
    %v762 = vmul.f32 %v761, %v535
    %v763 = vmul.f32 %v761, %v540
    %v764 = vadd.f32 %v758, %v762
    %v765 = vadd.f32 %v759, %v763
    %s766 = sld [smem:[#allocation4 + $0x9]]
    %v767 = vstv %s766
    %v768 = vadd.f32 %v764, %v767
    %v769 = vadd.f32 %v765, %v767
    %s770 = scalar_lea.vmem %s5, 144
    %771 = vst.msk [vmem:[%s770] sm:$0xff] %vm49, %v768
    %772 = vst.msk [vmem:[%s770 + $0x8] sm:$0xf] %vm564, %v769
    %s773 = sld [smem:[#allocation2 + $0xa]]
    %v774 = vstv %s773
    %v775 = vmul.f32 %v774, %v211
    %v776 = vmul.f32 %v774, %v216
    %s777 = sld [smem:[#allocation2 + $0x1e]]
    %v778 = vstv %s777
    %v779 = vmul.f32 %v778, %v373
    %v780 = vmul.f32 %v778, %v378
    %v781 = vadd.f32 %v775, %v779
    %v782 = vadd.f32 %v776, %v780
    %s783 = sld [smem:[#allocation2 + $0x32]]
    %v784 = vstv %s783
    %v785 = vmul.f32 %v784, %v535
    %v786 = vmul.f32 %v784, %v540
    %v787 = vadd.f32 %v781, %v785
    %v788 = vadd.f32 %v782, %v786
    %s789 = sld [smem:[#allocation4 + $0xa]]
    %v790 = vstv %s789
    %v791 = vadd.f32 %v787, %v790
    %v792 = vadd.f32 %v788, %v790
    %s793 = scalar_lea.vmem %s5, 160
    %794 = vst.msk [vmem:[%s793] sm:$0xff] %vm49, %v791
    %795 = vst.msk [vmem:[%s793 + $0x8] sm:$0xf] %vm564, %v792
    %s796 = sld [smem:[#allocation2 + $0xb]]
    %v797 = vstv %s796
    %v798 = vmul.f32 %v797, %v211
    %v799 = vmul.f32 %v797, %v216
    %s800 = sld [smem:[#allocation2 + $0x1f]]
    %v801 = vstv %s800
    %v802 = vmul.f32 %v801, %v373
    %v803 = vmul.f32 %v801, %v378
    %v804 = vadd.f32 %v798, %v802
    %v805 = vadd.f32 %v799, %v803
    %s806 = sld [smem:[#allocation2 + $0x33]]
    %v807 = vstv %s806
    %v808 = vmul.f32 %v807, %v535
    %v809 = vmul.f32 %v807, %v540
    %v810 = vadd.f32 %v804, %v808
    %v811 = vadd.f32 %v805, %v809
    %s812 = sld [smem:[#allocation4 + $0xb]]
    %v813 = vstv %s812
    %v814 = vadd.f32 %v810, %v813
    %v815 = vadd.f32 %v811, %v813
    %s816 = scalar_lea.vmem %s5, 176
    %817 = vst.msk [vmem:[%s816] sm:$0xff] %vm49, %v814
    %818 = vst.msk [vmem:[%s816 + $0x8] sm:$0xf] %vm564, %v815
    %s819 = sld [smem:[#allocation2 + $0xc]]
    %v820 = vstv %s819
    %v821 = vmul.f32 %v820, %v211
    %v822 = vmul.f32 %v820, %v216
    %s823 = sld [smem:[#allocation2 + $0x20]]
    %v824 = vstv %s823
    %v825 = vmul.f32 %v824, %v373
    %v826 = vmul.f32 %v824, %v378
    %v827 = vadd.f32 %v821, %v825
    %v828 = vadd.f32 %v822, %v826
    %s829 = sld [smem:[#allocation2 + $0x34]]
    %v830 = vstv %s829
    %v831 = vmul.f32 %v830, %v535
    %v832 = vmul.f32 %v830, %v540
    %v833 = vadd.f32 %v827, %v831
    %v834 = vadd.f32 %v828, %v832
    %s835 = sld [smem:[#allocation4 + $0xc]]
    %v836 = vstv %s835
    %v837 = vadd.f32 %v833, %v836
    %v838 = vadd.f32 %v834, %v836
    %s839 = scalar_lea.vmem %s5, 192
    %840 = vst.msk [vmem:[%s839] sm:$0xff] %vm49, %v837
    %841 = vst.msk [vmem:[%s839 + $0x8] sm:$0xf] %vm564, %v838
    %s842 = sld [smem:[#allocation2 + $0xd]]
    %v843 = vstv %s842
    %v844 = vmul.f32 %v843, %v211
    %v845 = vmul.f32 %v843, %v216
    %s846 = sld [smem:[#allocation2 + $0x21]]
    %v847 = vstv %s846
    %v848 = vmul.f32 %v847, %v373
    %v849 = vmul.f32 %v847, %v378
    %v850 = vadd.f32 %v844, %v848
    %v851 = vadd.f32 %v845, %v849
    %s852 = sld [smem:[#allocation2 + $0x35]]
    %v853 = vstv %s852
    %v854 = vmul.f32 %v853, %v535
    %v855 = vmul.f32 %v853, %v540
    %v856 = vadd.f32 %v850, %v854
    %v857 = vadd.f32 %v851, %v855
    %s858 = sld [smem:[#allocation4 + $0xd]]
    %v859 = vstv %s858
    %v860 = vadd.f32 %v856, %v859
    %v861 = vadd.f32 %v857, %v859
    %s862 = scalar_lea.vmem %s5, 208
    %863 = vst.msk [vmem:[%s862] sm:$0xff] %vm49, %v860
    %864 = vst.msk [vmem:[%s862 + $0x8] sm:$0xf] %vm564, %v861
    %s865 = sld [smem:[#allocation2 + $0xe]]
    %v866 = vstv %s865
    %v867 = vmul.f32 %v866, %v211
    %v868 = vmul.f32 %v866, %v216
    %s869 = sld [smem:[#allocation2 + $0x22]]
    %v870 = vstv %s869
    %v871 = vmul.f32 %v870, %v373
    %v872 = vmul.f32 %v870, %v378
    %v873 = vadd.f32 %v867, %v871
    %v874 = vadd.f32 %v868, %v872
    %s875 = sld [smem:[#allocation2 + $0x36]]
    %v876 = vstv %s875
    %v877 = vmul.f32 %v876, %v535
    %v878 = vmul.f32 %v876, %v540
    %v879 = vadd.f32 %v873, %v877
    %v880 = vadd.f32 %v874, %v878
    %s881 = sld [smem:[#allocation4 + $0xe]]
    %v882 = vstv %s881
    %v883 = vadd.f32 %v879, %v882
    %v884 = vadd.f32 %v880, %v882
    %s885 = scalar_lea.vmem %s5, 224
    %886 = vst.msk [vmem:[%s885] sm:$0xff] %vm49, %v883
    %887 = vst.msk [vmem:[%s885 + $0x8] sm:$0xf] %vm564, %v884
    %s888 = sld [smem:[#allocation2 + $0xf]]
    %v889 = vstv %s888
    %v890 = vmul.f32 %v889, %v211
    %v891 = vmul.f32 %v889, %v216
    %s892 = sld [smem:[#allocation2 + $0x23]]
    %v893 = vstv %s892
    %v894 = vmul.f32 %v893, %v373
    %v895 = vmul.f32 %v893, %v378
    %v896 = vadd.f32 %v890, %v894
    %v897 = vadd.f32 %v891, %v895
    %s898 = sld [smem:[#allocation2 + $0x37]]
    %v899 = vstv %s898
    %v900 = vmul.f32 %v899, %v535
    %v901 = vmul.f32 %v899, %v540
    %v902 = vadd.f32 %v896, %v900
    %v903 = vadd.f32 %v897, %v901
    %s904 = sld [smem:[#allocation4 + $0xf]]
    %v905 = vstv %s904
    %v906 = vadd.f32 %v902, %v905
    %v907 = vadd.f32 %v903, %v905
    %s908 = scalar_lea.vmem %s5, 240
    %909 = vst.msk [vmem:[%s908] sm:$0xff] %vm49, %v906
    %910 = vst.msk [vmem:[%s908 + $0x8] sm:$0xf] %vm564, %v907
    %s911 = sld [smem:[#allocation2 + $0x10]]
    %v912 = vstv %s911
    %v913 = vmul.f32 %v912, %v211
    %v914 = vmul.f32 %v912, %v216
    %s915 = sld [smem:[#allocation2 + $0x24]]
    %v916 = vstv %s915
    %v917 = vmul.f32 %v916, %v373
    %v918 = vmul.f32 %v916, %v378
    %v919 = vadd.f32 %v913, %v917
    %v920 = vadd.f32 %v914, %v918
    %s921 = sld [smem:[#allocation2 + $0x38]]
    %v922 = vstv %s921
    %v923 = vmul.f32 %v922, %v535
    %v924 = vmul.f32 %v922, %v540
    %v925 = vadd.f32 %v919, %v923
    %v926 = vadd.f32 %v920, %v924
    %s927 = sld [smem:[#allocation4 + $0x10]]
    %v928 = vstv %s927
    %v929 = vadd.f32 %v925, %v928
    %v930 = vadd.f32 %v926, %v928
    %s931 = scalar_lea.vmem %s5, 256
    %932 = vst.msk [vmem:[%s931] sm:$0xff] %vm49, %v929
    %933 = vst.msk [vmem:[%s931 + $0x8] sm:$0xf] %vm564, %v930
    %s934 = sld [smem:[#allocation2 + $0x11]]
    %v935 = vstv %s934
    %v936 = vmul.f32 %v935, %v211
    %v937 = vmul.f32 %v935, %v216
    %s938 = sld [smem:[#allocation2 + $0x25]]
    %v939 = vstv %s938
    %v940 = vmul.f32 %v939, %v373
    %v941 = vmul.f32 %v939, %v378
    %v942 = vadd.f32 %v936, %v940
    %v943 = vadd.f32 %v937, %v941
    %s944 = sld [smem:[#allocation2 + $0x39]]
    %v945 = vstv %s944
    %v946 = vmul.f32 %v945, %v535
    %v947 = vmul.f32 %v945, %v540
    %v948 = vadd.f32 %v942, %v946
    %v949 = vadd.f32 %v943, %v947
    %s950 = sld [smem:[#allocation4 + $0x11]]
    %v951 = vstv %s950
    %v952 = vadd.f32 %v948, %v951
    %v953 = vadd.f32 %v949, %v951
    %s954 = scalar_lea.vmem %s5, 272
    %955 = vst.msk [vmem:[%s954] sm:$0xff] %vm49, %v952
    %956 = vst.msk [vmem:[%s954 + $0x8] sm:$0xf] %vm564, %v953
    %s957 = sld [smem:[#allocation2 + $0x12]]
    %v958 = vstv %s957
    %v959 = vmul.f32 %v958, %v211
    %v960 = vmul.f32 %v958, %v216
    %s961 = sld [smem:[#allocation2 + $0x26]]
    %v962 = vstv %s961
    %v963 = vmul.f32 %v962, %v373
    %v964 = vmul.f32 %v962, %v378
    %v965 = vadd.f32 %v959, %v963
    %v966 = vadd.f32 %v960, %v964
    %s967 = sld [smem:[#allocation2 + $0x3a]]
    %v968 = vstv %s967
    %v969 = vmul.f32 %v968, %v535
    %v970 = vmul.f32 %v968, %v540
    %v971 = vadd.f32 %v965, %v969
    %v972 = vadd.f32 %v966, %v970
    %s973 = sld [smem:[#allocation4 + $0x12]]
    %v974 = vstv %s973
    %v975 = vadd.f32 %v971, %v974
    %v976 = vadd.f32 %v972, %v974
    %s977 = scalar_lea.vmem %s5, 288
    %978 = vst.msk [vmem:[%s977] sm:$0xff] %vm49, %v975
    %979 = vst.msk [vmem:[%s977 + $0x8] sm:$0xf] %vm564, %v976
    %s980 = sld [smem:[#allocation2 + $0x13]]
    %v981 = vstv %s980
    %v982 = vmul.f32 %v981, %v211
    %v983 = vmul.f32 %v981, %v216
    %s984 = sld [smem:[#allocation2 + $0x27]]
    %v985 = vstv %s984
    %v986 = vmul.f32 %v985, %v373
    %v987 = vmul.f32 %v985, %v378
    %v988 = vadd.f32 %v982, %v986
    %v989 = vadd.f32 %v983, %v987
    %s990 = sld [smem:[#allocation2 + $0x3b]]
    %v991 = vstv %s990
    %v992 = vmul.f32 %v991, %v535
    %v993 = vmul.f32 %v991, %v540
    %v994 = vadd.f32 %v988, %v992
    %v995 = vadd.f32 %v989, %v993
    %s996 = sld [smem:[#allocation4 + $0x13]]
    %v997 = vstv %s996
    %v998 = vadd.f32 %v994, %v997
    %v999 = vadd.f32 %v995, %v997
    %s1000 = scalar_lea.vmem %s5, 304
    %1001 = vst.msk [vmem:[%s1000] sm:$0xff] %vm49, %v998
    %1002 = vst.msk [vmem:[%s1000 + $0x8] sm:$0xf] %vm564, %v999
    // Predicated region
    $region30: #{object_in_hand_forward.2} parent=1 // pred_check
      _
    $region31: #{object_in_hand_forward.2} parent=1 // pred_check_branch
      %1004 = sbr.rel (0) target = $region33
    $region32: #{object_in_hand_forward.2} parent=1 // pred_region
      _
    $region33: #{object_in_hand_forward.2} parent=1 // pred_fallthru
      _
    // Predicated region
    $region34: #{object_in_hand_forward.2} parent=1 // pred_check
      _
    $region35: #{object_in_hand_forward.2} parent=1 // pred_check_branch
      %1006 = sbr.rel (0) target = $region37
    $region36: #{object_in_hand_forward.2} parent=1 // pred_region
      _
    $region37: #{object_in_hand_forward.2} parent=1 // pred_fallthru
      _
    %1007 = vsyncpa [#allocation3], 1
    %1008 = vsyncpa [#allocation5], 1

</llo_original>
